<compile_context>
chip_gen: v7x
topology: tpu7x:2x2x1
jax: 0.10.0
libtpu: 0.0.40
codegen_flags: <defaults>
</compile_context>

<pallas_src>
import functools
import math

import jax
import jax.numpy as jnp
from jax import lax
from jax.experimental import pallas as pl
from jax.experimental.pallas import tpu as pltpu

F32 = jnp.float32
BF16 = jnp.bfloat16
_LN_EPS = 1e-5  # PyTorch nn.LayerNorm default


@functools.lru_cache(maxsize=None)
def _vmem_limit_bytes():
    """Per-generation VMEM budget: ~3/4 of physical, capped at 100 MiB."""
    try:
        cap = getattr(pltpu.get_tpu_info(), "vmem_capacity_bytes", 64 * 1024 * 1024)
    except Exception:  # interpret mode / unknown platform
        cap = 64 * 1024 * 1024
    return int(min(100 * 1024 * 1024, (int(cap) * 3) // 4))


def _tile(dim, candidates):
    """Largest candidate that evenly tiles `dim`, else the full dim (a block equal to
    the full array dim always satisfies the (8,128) rule)."""
    for t in candidates:
        if dim % t == 0:
            return t
    return dim


# --------------------------- tiled linear (input_proj) ---------------------------

def _linear_kernel(x_ref, w_ref, b_ref, o_ref, acc_ref):
    k = pl.program_id(2)

    @pl.when(k == 0)
    def _():
        acc_ref[...] = jnp.zeros_like(acc_ref)

    acc_ref[...] += jnp.dot(x_ref[...].astype(BF16), w_ref[...],
                            preferred_element_type=F32)

    @pl.when(k == pl.num_programs(2) - 1)
    def _():
        o_ref[...] = (acc_ref[...] + b_ref[...]).astype(o_ref.dtype)


def linear(x, w, b, *, out_dtype=BF16):
    """y = x @ w + b.  x: (M, K), w: (K, N) bf16, b: (1, N) f32 -> (M, N) out_dtype.
    K is the reduction ('arbitrary') axis with an f32 VMEM accumulator."""
    M, K = x.shape
    N = w.shape[1]
    tm = _tile(M, (512, 256, 128))
    tn = _tile(N, (512, 256, 128))
    tk = _tile(K, (512, 256, 128))
    return pl.pallas_call(
        _linear_kernel,
        out_shape=jax.ShapeDtypeStruct((M, N), out_dtype),
        grid_spec=pltpu.PrefetchScalarGridSpec(
            num_scalar_prefetch=0,
            grid=(M // tm, N // tn, K // tk),
            in_specs=[
                pl.BlockSpec((tm, tk), lambda i, j, k: (i, k)),
                pl.BlockSpec((tk, tn), lambda i, j, k: (k, j)),
                pl.BlockSpec((1, tn), lambda i, j, k: (0, j)),
            ],
            out_specs=pl.BlockSpec((tm, tn), lambda i, j, k: (i, j)),
            scratch_shapes=[pltpu.VMEM((tm, tn), F32)],
        ),
        compiler_params=pltpu.CompilerParams(
            dimension_semantics=("parallel", "parallel", "arbitrary"),
            vmem_limit_bytes=_vmem_limit_bytes()),
    )(x, w, b)


# ------------------- fused QKV + RoPE + attention + out-proj accumulation -------------------

def _rotary_attention_kernel(x_ref, wq_ref, bq_ref, wk_ref, bk_ref, wv_ref, bv_ref,
                             cos_ref, sin_ref, wo_ref, bo_ref,
                             o_ref, acc_ref, qrot_ref, krot_ref, *, tq, h2):
    # grid = (batch, q_tile, head); head is the reduction axis for the out-projection.
    qi = pl.program_id(1)
    h = pl.program_id(2)
    q_start = pl.multiple_of(qi * tq, tq)

    @pl.when(h == 0)
    def _():
        acc_ref[...] = jnp.zeros_like(acc_ref)

    x_full = x_ref[0]                                  # (T, d_model) bf16
    x_q = x_ref[0, pl.ds(q_start, tq), :]              # (tq, d_model) bf16

    # Per-head projections (1/sqrt(head_dim) pre-folded into wq/bq); bf16 MXU, f32 acc.
    q = jnp.dot(x_q, wq_ref[0], preferred_element_type=F32) + bq_ref[0]      # (tq, hd)
    k = jnp.dot(x_full, wk_ref[0], preferred_element_type=F32) + bk_ref[0]   # (T, hd)
    v = jnp.dot(x_full, wv_ref[0], preferred_element_type=F32) + bv_ref[0]   # (T, hd)

    cos_k = cos_ref[0]                                 # (T, h2) f32
    sin_k = sin_ref[0]
    cos_q = cos_ref[0, pl.ds(q_start, tq), :]          # (tq, h2)
    sin_q = sin_ref[0, pl.ds(q_start, tq), :]

    # rotate_half RoPE on split halves, assembled into contiguous slabs so the score
    # matmul runs one full K=head_dim contraction.
    q1, q2 = q[:, :h2], q[:, h2:]
    k1, k2 = k[:, :h2], k[:, h2:]
    qrot_ref[:, :h2] = q1 * cos_q - q2 * sin_q
    qrot_ref[:, h2:] = q2 * cos_q + q1 * sin_q
    krot_ref[:, :h2] = k1 * cos_k - k2 * sin_k
    krot_ref[:, h2:] = k2 * cos_k + k1 * sin_k

    scores = lax.dot_general(qrot_ref[...].astype(BF16), krot_ref[...].astype(BF16),
                             (((1,), (1,)), ((), ())),
                             preferred_element_type=F32)                     # (tq, T)

    m = jnp.max(scores, axis=-1, keepdims=True)
    p = jnp.exp(scores - m)
    w = p * pl.reciprocal(jnp.sum(p, axis=-1, keepdims=True), approx=True)
    ctx = jnp.dot(w.astype(BF16), v.astype(BF16), preferred_element_type=F32)  # (tq, hd)

    # Accumulate the output projection per head -> lane-dense (tq, d_model) writes only.
    acc_ref[...] += jnp.dot(ctx.astype(BF16), wo_ref[0], preferred_element_type=F32)

    @pl.when(h == pl.num_programs(2) - 1)
    def _():
        o_ref[0] = (acc_ref[...] + bo_ref[...]).astype(o_ref.dtype)


def rotary_self_attention(x, wq, bq, wk, bk, wv, bv, cos, sin, wo, bo):
    B, T, d_model = x.shape
    H, _, hd = wq.shape
    h2 = hd // 2
    tq = _tile(T, (256, 128))
    kernel = functools.partial(_rotary_attention_kernel, tq=tq, h2=h2)
    head_w = pl.BlockSpec((1, d_model, hd), lambda b, i, h: (h, 0, 0))
    head_b = pl.BlockSpec((1, 1, hd), lambda b, i, h: (h, 0, 0))
    head_t = pl.BlockSpec((1, T, h2), lambda b, i, h: (h, 0, 0))
    return pl.pallas_call(
        kernel,
        out_shape=jax.ShapeDtypeStruct((B, T, d_model), BF16),
        grid_spec=pltpu.PrefetchScalarGridSpec(
            num_scalar_prefetch=0,
            grid=(B, T // tq, H),
            in_specs=[
                pl.BlockSpec((1, T, d_model), lambda b, i, h: (b, 0, 0)),   # x (full seq)
                head_w, head_b,                                             # Wq, bq (scaled)
                head_w, head_b,                                             # Wk, bk
                head_w, head_b,                                             # Wv, bv
                head_t, head_t,                                             # cos, sin
                pl.BlockSpec((1, hd, d_model), lambda b, i, h: (h, 0, 0)),  # Wo slice
                pl.BlockSpec((1, d_model), lambda b, i, h: (0, 0)),         # bo
            ],
            out_specs=pl.BlockSpec((1, tq, d_model), lambda b, i, h: (b, i, 0)),
            scratch_shapes=[
                pltpu.VMEM((tq, d_model), F32),   # out-projection accumulator
                pltpu.VMEM((tq, hd), F32),        # rotated Q slab
                pltpu.VMEM((T, hd), F32),         # rotated K slab
            ],
        ),
        compiler_params=pltpu.CompilerParams(
            dimension_semantics=("parallel", "parallel", "arbitrary"),
            vmem_limit_bytes=_vmem_limit_bytes()),
    )(x, wq, bq, wk, bk, wv, bv, cos, sin, wo, bo)


# ------------------- fused LayerNorm -> Linear -> ReLU -> LayerNorm -------------------

def _ln_linear_relu_ln_kernel(x_ref, g1_ref, bt1_ref, w_ref, b_ref, g2_ref, bt2_ref,
                              o_ref, *, eps):
    x = x_ref[...].astype(F32)                         # (tm, d_model)
    mu = jnp.mean(x, axis=-1, keepdims=True)
    xc = x - mu
    var = jnp.mean(xc * xc, axis=-1, keepdims=True)
    y = (xc * lax.rsqrt(var + eps)) * g1_ref[...] + bt1_ref[...]

    y = jnp.dot(y.astype(BF16), w_ref[...], preferred_element_type=F32) + b_ref[...]
    y = jnp.maximum(y, 0.0)                            # ReLU

    mu2 = jnp.mean(y, axis=-1, keepdims=True)
    yc = y - mu2
    var2 = jnp.mean(yc * yc, axis=-1, keepdims=True)
    o_ref[...] = ((yc * lax.rsqrt(var2 + eps)) * g2_ref[...] + bt2_ref[...]).astype(o_ref.dtype)


def ln_linear_relu_ln(x, g1, bt1, w, b, g2, bt2, *, out_dtype=BF16, eps=_LN_EPS):
    M, d_model = x.shape
    tm = _tile(M, (512, 256, 128))
    kernel = functools.partial(_ln_linear_relu_ln_kernel, eps=eps)
    vec = pl.BlockSpec((1, d_model), lambda i: (0, 0))
    return pl.pallas_call(
        kernel,
        out_shape=jax.ShapeDtypeStruct((M, d_model), out_dtype),
        grid_spec=pltpu.PrefetchScalarGridSpec(
            num_scalar_prefetch=0,
            grid=(M // tm,),
            in_specs=[
                pl.BlockSpec((tm, d_model), lambda i: (i, 0)),
                vec, vec,
                pl.BlockSpec((d_model, d_model), lambda i: (0, 0)),
                vec, vec, vec,
            ],
            out_specs=pl.BlockSpec((tm, d_model), lambda i: (i, 0)),
        ),
        compiler_params=pltpu.CompilerParams(
            dimension_semantics=("parallel",),
            vmem_limit_bytes=_vmem_limit_bytes()),
    )(x, g1, bt1, w, b, g2, bt2)


# --------------------------------- JAX glue -------------------------------------

def _rope_tables(T, n_heads, head_dim):
    """cos/sin of shape (H, T, head_dim//2); row (h, t) is the table for position
    tau = (t*n_heads + h) mod T, reproducing the module's reshape-before-RoPE."""
    h2 = head_dim // 2
    inv_freq = 1.0 / (10000.0 ** (jnp.arange(0, head_dim, 2, dtype=F32) / head_dim))
    tau = (jnp.arange(T, dtype=jnp.int32)[None, :] * n_heads
           + jnp.arange(n_heads, dtype=jnp.int32)[:, None]) % T            # (H, T)
    freqs = tau.astype(F32)[..., None] * inv_freq[None, None, :]           # (H, T, h2)
    return jnp.cos(freqs), jnp.sin(freqs)


def init_params(key, input_dim, d_model, n_heads, n_layers):
    head_dim = d_model // n_heads
    scale = 1.0 / math.sqrt(head_dim)

    def dense(k, fan_in, fan_out):
        kw, kb = jax.random.split(k)
        bound = 1.0 / math.sqrt(fan_in)
        w = jax.random.uniform(kw, (fan_in, fan_out), F32, -bound, bound)
        b = jax.random.uniform(kb, (1, fan_out), F32, -bound, bound)
        return w, b

    def per_head(w_cols, b_cols):
        # (d_model, d_model)/(1, d_model) -> (H, d_model, hd)/(H, 1, hd)
        w_h = w_cols.reshape(d_model, n_heads, head_dim).transpose(1, 0, 2)
        b_h = b_cols.reshape(1, n_heads, head_dim).transpose(1, 0, 2)
        return w_h, b_h

    keys = jax.random.split(key, n_layers + 1)
    w_in, b_in = dense(keys[0], input_dim, d_model)
    layers = []
    for lk in keys[1:]:
        k1, k2, k3 = jax.random.split(lk, 3)
        w_qkv, b_qkv = dense(k1, d_model, 3 * d_model)   # PyTorch-equivalent fused layout
        w_out, b_out = dense(k2, d_model, d_model)
        w_mlp, b_mlp = dense(k3, d_model, d_model)

        wq, bq = per_head(w_qkv[:, :d_model], b_qkv[:, :d_model])
        wk, bk = per_head(w_qkv[:, d_model:2 * d_model], b_qkv[:, d_model:2 * d_model])
        wv, bv = per_head(w_qkv[:, 2 * d_model:], b_qkv[:, 2 * d_model:])
        wq, bq = wq * scale, bq * scale                  # fold 1/sqrt(head_dim) into Q
        wo = w_out.reshape(n_heads, head_dim, d_model)   # per-head out-projection rows

        layers.append(dict(
            wq=wq.astype(BF16), bq=bq, wk=wk.astype(BF16), bk=bk,
            wv=wv.astype(BF16), bv=bv, wo=wo.astype(BF16), bo=b_out,
            ln1_g=jnp.ones((1, d_model), F32), ln1_b=jnp.zeros((1, d_model), F32),
            w_mlp=w_mlp.astype(BF16), b_mlp=b_mlp,
            ln2_g=jnp.ones((1, d_model), F32), ln2_b=jnp.zeros((1, d_model), F32)))
    return dict(w_in=w_in.astype(BF16), b_in=b_in, layers=layers)


def rotary_transformer_encoder(params, x, n_heads):
    B, T, _ = x.shape
    d_model = params["w_in"].shape[1]
    head_dim = d_model // n_heads
    cos, sin = _rope_tables(T, n_heads, head_dim)

    h = linear(x.reshape(B * T, -1), params["w_in"], params["b_in"])   # bf16 activations
    h = h.reshape(B, T, d_model)
    n_layers = len(params["layers"])
    for li, layer in enumerate(params["layers"]):
        a = rotary_self_attention(h, layer["wq"], layer["bq"], layer["wk"], layer["bk"],
                                  layer["wv"], layer["bv"], cos, sin,
                                  layer["wo"], layer["bo"])
        out_dtype = F32 if li == n_layers - 1 else BF16
        h = ln_linear_relu_ln(a.reshape(B * T, d_model),
                              layer["ln1_g"], layer["ln1_b"],
                              layer["w_mlp"], layer["b_mlp"],
                              layer["ln2_g"], layer["ln2_b"],
                              out_dtype=out_dtype).reshape(B, T, d_model)
    return jnp.transpose(h, (1, 0, 2))   # matches the module's final permute(1, 0, 2)


@functools.partial(jax.jit, static_argnames=("n_heads",))
def forward(params, x, n_heads):
    return rotary_transformer_encoder(params, x, n_heads)


if __name__ == "__main__":
    input_dim, d_model, n_heads, n_layers = 16, 64, 4, 2
    B, T = 2, 8

    root = jax.random.PRNGKey(0)
    kp, kx = jax.random.split(root)
    params = init_params(kp, input_dim, d_model, n_heads, n_layers)
    x = jax.random.normal(kx, (B, T, input_dim), F32)

    out = forward(params, x, n_heads)
    out = jax.block_until_ready(out)
    assert out.shape == (T, B, d_model)
    print("KERNEL_OK")
</pallas_src>

<mosaic_0001>
module attributes {stable_mosaic.version = 11 : i64} {
  func.func @_linear_kernel(%arg0: i32, %arg1: i32, %arg2: i32, %arg3: memref<16x16xf32, #tpu.memory_space<vmem>>, %arg4: memref<16x64xbf16, #tpu.memory_space<vmem>>, %arg5: memref<1x64xf32, #tpu.memory_space<vmem>>, %arg6: memref<16x64xbf16, #tpu.memory_space<vmem>>, %arg7: memref<16x64xf32, #tpu.memory_space<vmem>>) attributes {dimension_semantics = [#tpu.dimension_semantics<parallel>, #tpu.dimension_semantics<parallel>, #tpu.dimension_semantics<arbitrary>], iteration_bounds = array<i64: 1, 1, 1>, scalar_prefetch = 0 : i64, scratch_operands = 1 : i64, tpu.core_type = #tpu.core_type<tc>, window_params = [{transform_indices = @transform_0, window_bounds = array<i64: 16, 16>}, {transform_indices = @transform_1, window_bounds = array<i64: 16, 64>}, {transform_indices = @transform_2, window_bounds = array<i64: 1, 64>}, {transform_indices = @transform_3, window_bounds = array<i64: 16, 64>}]} {
    %c0_i32 = arith.constant 0 : i32
    %0 = arith.cmpi eq, %arg2, %c0_i32 : i32
    %1 = arith.extui %0 : i1 to i32
    %c0_i32_0 = arith.constant 0 : i32
    %2 = arith.cmpi ne, %1, %c0_i32_0 : i32
    scf.if %2 {
      %cst_10 = arith.constant 0.000000e+00 : f32
      %13 = vector.broadcast %cst_10 : f32 to vector<16x64xf32>
      %c0_11 = arith.constant 0 : index
      %c0_12 = arith.constant 0 : index
      %14 = vector.load %arg7[%c0_11, %c0_12] : memref<16x64xf32, #tpu.memory_space<vmem>>, vector<16x64xf32>
      tpu.vector_store %arg7[%c0_11, %c0_12], %13 {strides = array<i32>} : memref<16x64xf32, #tpu.memory_space<vmem>>, vector<16x64xf32>,
    } else {
    }
    %c0 = arith.constant 0 : index
    %c0_1 = arith.constant 0 : index
    %3 = vector.load %arg7[%c0, %c0_1] : memref<16x64xf32, #tpu.memory_space<vmem>>, vector<16x64xf32>
    %c0_2 = arith.constant 0 : index
    %c0_3 = arith.constant 0 : index
    %4 = vector.load %arg3[%c0_2, %c0_3] : memref<16x16xf32, #tpu.memory_space<vmem>>, vector<16x16xf32>
    %5 = arith.truncf %4 : vector<16x16xf32> to vector<16x16xbf16>
    %c0_4 = arith.constant 0 : index
    %c0_5 = arith.constant 0 : index
    %6 = vector.load %arg4[%c0_4, %c0_5] : memref<16x64xbf16, #tpu.memory_space<vmem>>, vector<16x64xbf16>
    %cst = arith.constant dense<0.000000e+00> : vector<16x64xf32>
    %7 = tpu.matmul %5, %6, %cst {dimension_numbers = #tpu.dot_dimension_numbers<[1], [0], [0], [1], [0, 0, 1, 1], [], []>} : vector<16x16xbf16>, vector<16x64xbf16>, vector<16x64xf32> -> vector<16x64xf32>
    %8 = arith.addf %3, %7 : vector<16x64xf32>
    %c0_6 = arith.constant 0 : index
    %c0_7 = arith.constant 0 : index
    %9 = vector.load %arg7[%c0_6, %c0_7] : memref<16x64xf32, #tpu.memory_space<vmem>>, vector<16x64xf32>
    tpu.vector_store %arg7[%c0_6, %c0_7], %8 {strides = array<i32>} : memref<16x64xf32, #tpu.memory_space<vmem>>, vector<16x64xf32>,
    %c0_i32_8 = arith.constant 0 : i32
    %10 = arith.cmpi eq, %arg2, %c0_i32_8 : i32
    %11 = arith.extui %10 : i1 to i32
    %c0_i32_9 = arith.constant 0 : i32
    %12 = arith.cmpi ne, %11, %c0_i32_9 : i32
    scf.if %12 {
      %c0_10 = arith.constant 0 : index
      %c0_11 = arith.constant 0 : index
      %13 = vector.load %arg7[%c0_10, %c0_11] : memref<16x64xf32, #tpu.memory_space<vmem>>, vector<16x64xf32>
      %c0_12 = arith.constant 0 : index
      %c0_13 = arith.constant 0 : index
      %14 = vector.load %arg5[%c0_12, %c0_13] : memref<1x64xf32, #tpu.memory_space<vmem>>, vector<1x64xf32>
      %15 = vector.broadcast %14 : vector<1x64xf32> to vector<16x64xf32>
      %16 = arith.addf %13, %15 : vector<16x64xf32>
      %17 = arith.truncf %16 : vector<16x64xf32> to vector<16x64xbf16>
      %c0_14 = arith.constant 0 : index
      %c0_15 = arith.constant 0 : index
      %18 = vector.load %arg6[%c0_14, %c0_15] : memref<16x64xbf16, #tpu.memory_space<vmem>>, vector<16x64xbf16>
      tpu.vector_store %arg6[%c0_14, %c0_15], %17 {strides = array<i32>} : memref<16x64xbf16, #tpu.memory_space<vmem>>, vector<16x64xbf16>,
    } else {
    }
    return
  }
  func.func @transform_0(%arg0: i32, %arg1: i32, %arg2: i32) -> (i32, i32) {
    %c0_i32 = arith.constant 0 : i32
    return %arg0, %arg2 : i32, i32
  }
  func.func @transform_1(%arg0: i32, %arg1: i32, %arg2: i32) -> (i32, i32) {
    %c0_i32 = arith.constant 0 : i32
    return %arg2, %arg1 : i32, i32
  }
  func.func @transform_2(%arg0: i32, %arg1: i32, %arg2: i32) -> (i32, i32) {
    %c0_i32 = arith.constant 0 : i32
    %c0_i32_0 = arith.constant 0 : i32
    return %c0_i32, %arg1 : i32, i32
  }
  func.func @transform_3(%arg0: i32, %arg1: i32, %arg2: i32) -> (i32, i32) {
    %c0_i32 = arith.constant 0 : i32
    return %arg0, %arg1 : i32, i32
  }
}

module attributes {stable_mosaic.version = 11 : i64} {
  func.func @_rotary_attention_kernel(%arg0: i32, %arg1: i32, %arg2: i32, %arg3: memref<1x8x64xbf16, #tpu.memory_space<vmem>>, %arg4: memref<1x64x16xbf16, #tpu.memory_space<vmem>>, %arg5: memref<1x1x16xf32, #tpu.memory_space<vmem>>, %arg6: memref<1x64x16xbf16, #tpu.memory_space<vmem>>, %arg7: memref<1x1x16xf32, #tpu.memory_space<vmem>>, %arg8: memref<1x64x16xbf16, #tpu.memory_space<vmem>>, %arg9: memref<1x1x16xf32, #tpu.memory_space<vmem>>, %arg10: memref<1x8x8xf32, #tpu.memory_space<vmem>>, %arg11: memref<1x8x8xf32, #tpu.memory_space<vmem>>, %arg12: memref<1x16x64xbf16, #tpu.memory_space<vmem>>, %arg13: memref<1x64xf32, #tpu.memory_space<vmem>>, %arg14: memref<1x8x64xbf16, #tpu.memory_space<vmem>>, %arg15: memref<8x64xf32, #tpu.memory_space<vmem>>, %arg16: memref<8x16xf32, #tpu.memory_space<vmem>>, %arg17: memref<8x16xf32, #tpu.memory_space<vmem>>) attributes {dimension_semantics = [#tpu.dimension_semantics<parallel>, #tpu.dimension_semantics<parallel>, #tpu.dimension_semantics<arbitrary>], iteration_bounds = array<i64: 2, 1, 4>, scalar_prefetch = 0 : i64, scratch_operands = 3 : i64, tpu.core_type = #tpu.core_type<tc>, window_params = [{transform_indices = @transform_0, window_bounds = array<i64: 1, 8, 64>}, {transform_indices = @transform_1, window_bounds = array<i64: 1, 64, 16>}, {transform_indices = @transform_2, window_bounds = array<i64: 1, 1, 16>}, {transform_indices = @transform_3, window_bounds = array<i64: 1, 64, 16>}, {transform_indices = @transform_4, window_bounds = array<i64: 1, 1, 16>}, {transform_indices = @transform_5, window_bounds = array<i64: 1, 64, 16>}, {transform_indices = @transform_6, window_bounds = array<i64: 1, 1, 16>}, {transform_indices = @transform_7, window_bounds = array<i64: 1, 8, 8>}, {transform_indices = @transform_8, window_bounds = array<i64: 1, 8, 8>}, {transform_indices = @transform_9, window_bounds = array<i64: 1, 16, 64>}, {pipeline_mode = #tpu.pipeline_mode<synchronous>, transform_indices = @transform_10, window_bounds = array<i64: 1, 64>}, {transform_indices = @transform_11, window_bounds = array<i64: 1, 8, 64>}]} {
    %c8_i32 = arith.constant 8 : i32
    %0 = arith.muli %arg1, %c8_i32 : i32
    %1 = tpu.assume_multiple %0, 8 : i32
    %c0_i32 = arith.constant 0 : i32
    %2 = arith.cmpi eq, %arg2, %c0_i32 : i32
    %3 = arith.extui %2 : i1 to i32
    %c0_i32_0 = arith.constant 0 : i32
    %4 = arith.cmpi ne, %3, %c0_i32_0 : i32
    scf.if %4 {
      %cst_59 = arith.constant 0.000000e+00 : f32
      %89 = vector.broadcast %cst_59 : f32 to vector<8x64xf32>
      %c0_60 = arith.constant 0 : index
      %c0_61 = arith.constant 0 : index
      %90 = vector.load %arg15[%c0_60, %c0_61] : memref<8x64xf32, #tpu.memory_space<vmem>>, vector<8x64xf32>
      tpu.vector_store %arg15[%c0_60, %c0_61], %89 {strides = array<i32>} : memref<8x64xf32, #tpu.memory_space<vmem>>, vector<8x64xf32>,
    } else {
    }
    %c0 = arith.constant 0 : index
    %c0_1 = arith.constant 0 : index
    %c0_2 = arith.constant 0 : index
    %5 = vector.load %arg3[%c0, %c0_1, %c0_2] : memref<1x8x64xbf16, #tpu.memory_space<vmem>>, vector<1x8x64xbf16>
    %6 = vector.shape_cast %5 : vector<1x8x64xbf16> to vector<8x64xbf16>
    %c0_3 = arith.constant 0 : index
    %7 = arith.index_cast %1 : i32 to index
    %c0_4 = arith.constant 0 : index
    %8 = vector.load %arg3[%c0_3, %7, %c0_4] : memref<1x8x64xbf16, #tpu.memory_space<vmem>>, vector<1x8x64xbf16>
    %9 = vector.shape_cast %8 : vector<1x8x64xbf16> to vector<8x64xbf16>
    %c0_5 = arith.constant 0 : index
    %c0_6 = arith.constant 0 : index
    %c0_7 = arith.constant 0 : index
    %10 = vector.load %arg4[%c0_5, %c0_6, %c0_7] : memref<1x64x16xbf16, #tpu.memory_space<vmem>>, vector<1x64x16xbf16>
    %11 = vector.shape_cast %10 : vector<1x64x16xbf16> to vector<64x16xbf16>
    %cst = arith.constant dense<0.000000e+00> : vector<8x16xf32>
    %12 = tpu.matmul %9, %11, %cst {dimension_numbers = #tpu.dot_dimension_numbers<[1], [0], [0], [1], [0, 0, 1, 1], [], []>} : vector<8x64xbf16>, vector<64x16xbf16>, vector<8x16xf32> -> vector<8x16xf32>
    %c0_8 = arith.constant 0 : index
    %c0_9 = arith.constant 0 : index
    %c0_10 = arith.constant 0 : index
    %13 = vector.load %arg5[%c0_8, %c0_9, %c0_10] : memref<1x1x16xf32, #tpu.memory_space<vmem>>, vector<1x1x16xf32>
    %14 = vector.shape_cast %13 : vector<1x1x16xf32> to vector<1x16xf32>
    %15 = vector.broadcast %14 : vector<1x16xf32> to vector<8x16xf32>
    %16 = arith.addf %12, %15 : vector<8x16xf32>
    %c0_11 = arith.constant 0 : index
    %c0_12 = arith.constant 0 : index
    %c0_13 = arith.constant 0 : index
    %17 = vector.load %arg6[%c0_11, %c0_12, %c0_13] : memref<1x64x16xbf16, #tpu.memory_space<vmem>>, vector<1x64x16xbf16>
    %18 = vector.shape_cast %17 : vector<1x64x16xbf16> to vector<64x16xbf16>
    %cst_14 = arith.constant dense<0.000000e+00> : vector<8x16xf32>
    %19 = tpu.matmul %6, %18, %cst_14 {dimension_numbers = #tpu.dot_dimension_numbers<[1], [0], [0], [1], [0, 0, 1, 1], [], []>} : vector<8x64xbf16>, vector<64x16xbf16>, vector<8x16xf32> -> vector<8x16xf32>
    %c0_15 = arith.constant 0 : index
    %c0_16 = arith.constant 0 : index
    %c0_17 = arith.constant 0 : index
    %20 = vector.load %arg7[%c0_15, %c0_16, %c0_17] : memref<1x1x16xf32, #tpu.memory_space<vmem>>, vector<1x1x16xf32>
    %21 = vector.shape_cast %20 : vector<1x1x16xf32> to vector<1x16xf32>
    %22 = vector.broadcast %21 : vector<1x16xf32> to vector<8x16xf32>
    %23 = arith.addf %19, %22 : vector<8x16xf32>
    %c0_18 = arith.constant 0 : index
    %c0_19 = arith.constant 0 : index
    %c0_20 = arith.constant 0 : index
    %24 = vector.load %arg8[%c0_18, %c0_19, %c0_20] : memref<1x64x16xbf16, #tpu.memory_space<vmem>>, vector<1x64x16xbf16>
    %25 = vector.shape_cast %24 : vector<1x64x16xbf16> to vector<64x16xbf16>
    %cst_21 = arith.constant dense<0.000000e+00> : vector<8x16xf32>
    %26 = tpu.matmul %6, %25, %cst_21 {dimension_numbers = #tpu.dot_dimension_numbers<[1], [0], [0], [1], [0, 0, 1, 1], [], []>} : vector<8x64xbf16>, vector<64x16xbf16>, vector<8x16xf32> -> vector<8x16xf32>
    %c0_22 = arith.constant 0 : index
    %c0_23 = arith.constant 0 : index
    %c0_24 = arith.constant 0 : index
    %27 = vector.load %arg9[%c0_22, %c0_23, %c0_24] : memref<1x1x16xf32, #tpu.memory_space<vmem>>, vector<1x1x16xf32>
    %28 = vector.shape_cast %27 : vector<1x1x16xf32> to vector<1x16xf32>
    %29 = vector.broadcast %28 : vector<1x16xf32> to vector<8x16xf32>
    %30 = arith.addf %26, %29 : vector<8x16xf32>
    %c0_25 = arith.constant 0 : index
    %c0_26 = arith.constant 0 : index
    %c0_27 = arith.constant 0 : index
    %31 = vector.load %arg10[%c0_25, %c0_26, %c0_27] : memref<1x8x8xf32, #tpu.memory_space<vmem>>, vector<1x8x8xf32>
    %32 = vector.shape_cast %31 : vector<1x8x8xf32> to vector<8x8xf32>
    %c0_28 = arith.constant 0 : index
    %c0_29 = arith.constant 0 : index
    %c0_30 = arith.constant 0 : index
    %33 = vector.load %arg11[%c0_28, %c0_29, %c0_30] : memref<1x8x8xf32, #tpu.memory_space<vmem>>, vector<1x8x8xf32>
    %34 = vector.shape_cast %33 : vector<1x8x8xf32> to vector<8x8xf32>
    %c0_31 = arith.constant 0 : index
    %35 = arith.index_cast %1 : i32 to index
    %c0_32 = arith.constant 0 : index
    %36 = vector.load %arg10[%c0_31, %35, %c0_32] : memref<1x8x8xf32, #tpu.memory_space<vmem>>, vector<1x8x8xf32>
    %37 = vector.shape_cast %36 : vector<1x8x8xf32> to vector<8x8xf32>
    %c0_33 = arith.constant 0 : index
    %38 = arith.index_cast %1 : i32 to index
    %c0_34 = arith.constant 0 : index
    %39 = vector.load %arg11[%c0_33, %38, %c0_34] : memref<1x8x8xf32, #tpu.memory_space<vmem>>, vector<1x8x8xf32>
    %40 = vector.shape_cast %39 : vector<1x8x8xf32> to vector<8x8xf32>
    %41 = vector.extract_strided_slice %16 {offsets = [0, 0], sizes = [8, 8], strides = [1, 1]} : vector<8x16xf32> to vector<8x8xf32>
    %42 = vector.extract_strided_slice %16 {offsets = [0, 8], sizes = [8, 8], strides = [1, 1]} : vector<8x16xf32> to vector<8x8xf32>
    %43 = vector.extract_strided_slice %23 {offsets = [0, 0], sizes = [8, 8], strides = [1, 1]} : vector<8x16xf32> to vector<8x8xf32>
    %44 = vector.extract_strided_slice %23 {offsets = [0, 8], sizes = [8, 8], strides = [1, 1]} : vector<8x16xf32> to vector<8x8xf32>
    %45 = arith.mulf %41, %37 : vector<8x8xf32>
    %46 = arith.mulf %42, %40 : vector<8x8xf32>
    %47 = arith.subf %45, %46 : vector<8x8xf32>
    %c0_35 = arith.constant 0 : index
    %c0_36 = arith.constant 0 : index
    %48 = vector.load %arg16[%c0_35, %c0_36] : memref<8x16xf32, #tpu.memory_space<vmem>>, vector<8x8xf32>
    tpu.vector_store %arg16[%c0_35, %c0_36], %47 {strides = array<i32>} : memref<8x16xf32, #tpu.memory_space<vmem>>, vector<8x8xf32>,
    %49 = arith.mulf %42, %37 : vector<8x8xf32>
    %50 = arith.mulf %41, %40 : vector<8x8xf32>
    %51 = arith.addf %49, %50 : vector<8x8xf32>
    %c0_37 = arith.constant 0 : index
    %c8 = arith.constant 8 : index
    %52 = vector.load %arg16[%c0_37, %c8] : memref<8x16xf32, #tpu.memory_space<vmem>>, vector<8x8xf32>
    tpu.vector_store %arg16[%c0_37, %c8], %51 {strides = array<i32>} : memref<8x16xf32, #tpu.memory_space<vmem>>, vector<8x8xf32>,
    %53 = arith.mulf %43, %32 : vector<8x8xf32>
    %54 = arith.mulf %44, %34 : vector<8x8xf32>
    %55 = arith.subf %53, %54 : vector<8x8xf32>
    %c0_38 = arith.constant 0 : index
    %c0_39 = arith.constant 0 : index
    %56 = vector.load %arg17[%c0_38, %c0_39] : memref<8x16xf32, #tpu.memory_space<vmem>>, vector<8x8xf32>
    tpu.vector_store %arg17[%c0_38, %c0_39], %55 {strides = array<i32>} : memref<8x16xf32, #tpu.memory_space<vmem>>, vector<8x8xf32>,
    %57 = arith.mulf %44, %32 : vector<8x8xf32>
    %58 = arith.mulf %43, %34 : vector<8x8xf32>
    %59 = arith.addf %57, %58 : vector<8x8xf32>
    %c0_40 = arith.constant 0 : index
    %c8_41 = arith.constant 8 : index
    %60 = vector.load %arg17[%c0_40, %c8_41] : memref<8x16xf32, #tpu.memory_space<vmem>>, vector<8x8xf32>
    tpu.vector_store %arg17[%c0_40, %c8_41], %59 {strides = array<i32>} : memref<8x16xf32, #tpu.memory_space<vmem>>, vector<8x8xf32>,
    %c0_42 = arith.constant 0 : index
    %c0_43 = arith.constant 0 : index
    %61 = vector.load %arg16[%c0_42, %c0_43] : memref<8x16xf32, #tpu.memory_space<vmem>>, vector<8x16xf32>
    %62 = arith.truncf %61 : vector<8x16xf32> to vector<8x16xbf16>
    %c0_44 = arith.constant 0 : index
    %c0_45 = arith.constant 0 : index
    %63 = vector.load %arg17[%c0_44, %c0_45] : memref<8x16xf32, #tpu.memory_space<vmem>>, vector<8x16xf32>
    %64 = arith.truncf %63 : vector<8x16xf32> to vector<8x16xbf16>
    %cst_46 = arith.constant dense<0.000000e+00> : vector<8x8xf32>
    %65 = tpu.matmul %62, %64, %cst_46 {dimension_numbers = #tpu.dot_dimension_numbers<[1], [1], [0], [0], [0, 0, 1, 0], [], []>} : vector<8x16xbf16>, vector<8x16xbf16>, vector<8x8xf32> -> vector<8x8xf32>
    %cst_47 = arith.constant dense<0xFF800000> : vector<8xf32>
    %66 = vector.multi_reduction <maximumf>, %65, %cst_47 [1] : vector<8x8xf32> to vector<8xf32>
    %67 = vector.shape_cast %66 : vector<8xf32> to vector<8x1xf32>
    %68 = vector.broadcast %67 : vector<8x1xf32> to vector<8x8xf32>
    %69 = arith.subf %65, %68 : vector<8x8xf32>
    %70 = math.exp %69 : vector<8x8xf32>
    %cst_48 = arith.constant dense<0.000000e+00> : vector<8xf32>
    %71 = vector.multi_reduction <add>, %70, %cst_48 [1] : vector<8x8xf32> to vector<8xf32>
    %72 = vector.shape_cast %71 : vector<8xf32> to vector<8x1xf32>
    %73 = tpu.reciprocal %72 {approx = true} : vector<8x1xf32> -> vector<8x1xf32>
    %74 = vector.broadcast %73 : vector<8x1xf32> to vector<8x8xf32>
    %75 = arith.mulf %70, %74 : vector<8x8xf32>
    %76 = arith.truncf %75 : vector<8x8xf32> to vector<8x8xbf16>
    %77 = arith.truncf %30 : vector<8x16xf32> to vector<8x16xbf16>
    %cst_49 = arith.constant dense<0.000000e+00> : vector<8x16xf32>
    %78 = tpu.matmul %76, %77, %cst_49 {dimension_numbers = #tpu.dot_dimension_numbers<[1], [0], [0], [1], [0, 0, 1, 1], [], []>} : vector<8x8xbf16>, vector<8x16xbf16>, vector<8x16xf32> -> vector<8x16xf32>
    %c0_50 = arith.constant 0 : index
    %c0_51 = arith.constant 0 : index
    %79 = vector.load %arg15[%c0_50, %c0_51] : memref<8x64xf32, #tpu.memory_space<vmem>>, vector<8x64xf32>
    %80 = arith.truncf %78 : vector<8x16xf32> to vector<8x16xbf16>
    %c0_52 = arith.constant 0 : index
    %c0_53 = arith.constant 0 : index
    %c0_54 = arith.constant 0 : index
    %81 = vector.load %arg12[%c0_52, %c0_53, %c0_54] : memref<1x16x64xbf16, #tpu.memory_space<vmem>>, vector<1x16x64xbf16>
    %82 = vector.shape_cast %81 : vector<1x16x64xbf16> to vector<16x64xbf16>
    %cst_55 = arith.constant dense<0.000000e+00> : vector<8x64xf32>
    %83 = tpu.matmul %80, %82, %cst_55 {dimension_numbers = #tpu.dot_dimension_numbers<[1], [0], [0], [1], [0, 0, 1, 1], [], []>} : vector<8x16xbf16>, vector<16x64xbf16>, vector<8x64xf32> -> vector<8x64xf32>
    %84 = arith.addf %79, %83 : vector<8x64xf32>
    %c0_56 = arith.constant 0 : index
    %c0_57 = arith.constant 0 : index
    %85 = vector.load %arg15[%c0_56, %c0_57] : memref<8x64xf32, #tpu.memory_space<vmem>>, vector<8x64xf32>
    tpu.vector_store %arg15[%c0_56, %c0_57], %84 {strides = array<i32>} : memref<8x64xf32, #tpu.memory_space<vmem>>, vector<8x64xf32>,
    %c3_i32 = arith.constant 3 : i32
    %86 = arith.cmpi eq, %arg2, %c3_i32 : i32
    %87 = arith.extui %86 : i1 to i32
    %c0_i32_58 = arith.constant 0 : i32
    %88 = arith.cmpi ne, %87, %c0_i32_58 : i32
    scf.if %88 {
      %c0_59 = arith.constant 0 : index
      %c0_60 = arith.constant 0 : index
      %89 = vector.load %arg15[%c0_59, %c0_60] : memref<8x64xf32, #tpu.memory_space<vmem>>, vector<8x64xf32>
      %c0_61 = arith.constant 0 : index
      %c0_62 = arith.constant 0 : index
      %90 = vector.load %arg13[%c0_61, %c0_62] : memref<1x64xf32, #tpu.memory_space<vmem>>, vector<1x64xf32>
      %91 = vector.broadcast %90 : vector<1x64xf32> to vector<8x64xf32>
      %92 = arith.addf %89, %91 : vector<8x64xf32>
      %93 = arith.truncf %92 : vector<8x64xf32> to vector<8x64xbf16>
      %c0_63 = arith.constant 0 : index
      %c0_64 = arith.constant 0 : index
      %c0_65 = arith.constant 0 : index
      %94 = vector.load %arg14[%c0_63, %c0_64, %c0_65] : memref<1x8x64xbf16, #tpu.memory_space<vmem>>, vector<1x8x64xbf16>
      %95 = vector.shape_cast %94 : vector<1x8x64xbf16> to vector<8x64xbf16>
      %96 = vector.shape_cast %93 : vector<8x64xbf16> to vector<1x8x64xbf16>
      tpu.vector_store %arg14[%c0_63, %c0_64, %c0_65], %96 {strides = array<i32>} : memref<1x8x64xbf16, #tpu.memory_space<vmem>>, vector<1x8x64xbf16>,
    } else {
    }
    return
  }
  func.func @transform_0(%arg0: i32, %arg1: i32, %arg2: i32) -> (i32, i32, i32) {
    %c0_i32 = arith.constant 0 : i32
    %c0_i32_0 = arith.constant 0 : i32
    %c0_i32_1 = arith.constant 0 : i32
    return %arg0, %c0_i32, %c0_i32_0 : i32, i32, i32
  }
  func.func @transform_1(%arg0: i32, %arg1: i32, %arg2: i32) -> (i32, i32, i32) {
    %c0_i32 = arith.constant 0 : i32
    %c0_i32_0 = arith.constant 0 : i32
    %c0_i32_1 = arith.constant 0 : i32
    return %arg2, %c0_i32, %c0_i32_0 : i32, i32, i32
  }
  func.func @transform_2(%arg0: i32, %arg1: i32, %arg2: i32) -> (i32, i32, i32) {
    %c0_i32 = arith.constant 0 : i32
    %c0_i32_0 = arith.constant 0 : i32
    %c0_i32_1 = arith.constant 0 : i32
    return %arg2, %c0_i32, %c0_i32_0 : i32, i32, i32
  }
  func.func @transform_3(%arg0: i32, %arg1: i32, %arg2: i32) -> (i32, i32, i32) {
    %c0_i32 = arith.constant 0 : i32
    %c0_i32_0 = arith.constant 0 : i32
    %c0_i32_1 = arith.constant 0 : i32
    return %arg2, %c0_i32, %c0_i32_0 : i32, i32, i32
  }
  func.func @transform_4(%arg0: i32, %arg1: i32, %arg2: i32) -> (i32, i32, i32) {
    %c0_i32 = arith.constant 0 : i32
    %c0_i32_0 = arith.constant 0 : i32
    %c0_i32_1 = arith.constant 0 : i32
    return %arg2, %c0_i32, %c0_i32_0 : i32, i32, i32
  }
  func.func @transform_5(%arg0: i32, %arg1: i32, %arg2: i32) -> (i32, i32, i32) {
    %c0_i32 = arith.constant 0 : i32
    %c0_i32_0 = arith.constant 0 : i32
    %c0_i32_1 = arith.constant 0 : i32
    return %arg2, %c0_i32, %c0_i32_0 : i32, i32, i32
  }
  func.func @transform_6(%arg0: i32, %arg1: i32, %arg2: i32) -> (i32, i32, i32) {
    %c0_i32 = arith.constant 0 : i32
    %c0_i32_0 = arith.constant 0 : i32
    %c0_i32_1 = arith.constant 0 : i32
    return %arg2, %c0_i32, %c0_i32_0 : i32, i32, i32
  }
  func.func @transform_7(%arg0: i32, %arg1: i32, %arg2: i32) -> (i32, i32, i32) {
    %c0_i32 = arith.constant 0 : i32
    %c0_i32_0 = arith.constant 0 : i32
    %c0_i32_1 = arith.constant 0 : i32
    return %arg2, %c0_i32, %c0_i32_0 : i32, i32, i32
  }
  func.func @transform_8(%arg0: i32, %arg1: i32, %arg2: i32) -> (i32, i32, i32) {
    %c0_i32 = arith.constant 0 : i32
    %c0_i32_0 = arith.constant 0 : i32
    %c0_i32_1 = arith.constant 0 : i32
    return %arg2, %c0_i32, %c0_i32_0 : i32, i32, i32
  }
  func.func @transform_9(%arg0: i32, %arg1: i32, %arg2: i32) -> (i32, i32, i32) {
    %c0_i32 = arith.constant 0 : i32
    %c0_i32_0 = arith.constant 0 : i32
    %c0_i32_1 = arith.constant 0 : i32
    return %arg2, %c0_i32, %c0_i32_0 : i32, i32, i32
  }
  func.func @transform_10(%arg0: i32, %arg1: i32, %arg2: i32) -> (i32, i32) {
    %c0_i32 = arith.constant 0 : i32
    %c0_i32_0 = arith.constant 0 : i32
    %c0_i32_1 = arith.constant 0 : i32
    return %c0_i32, %c0_i32_0 : i32, i32
  }
  func.func @transform_11(%arg0: i32, %arg1: i32, %arg2: i32) -> (i32, i32, i32) {
    %c0_i32 = arith.constant 0 : i32
    %c0_i32_0 = arith.constant 0 : i32
    return %arg0, %arg1, %c0_i32 : i32, i32, i32
  }
}

module attributes {stable_mosaic.version = 11 : i64} {
  func.func @_ln_linear_relu_ln_kernel(%arg0: i32, %arg1: memref<16x64xbf16, #tpu.memory_space<vmem>>, %arg2: memref<1x64xf32, #tpu.memory_space<vmem>>, %arg3: memref<1x64xf32, #tpu.memory_space<vmem>>, %arg4: memref<64x64xbf16, #tpu.memory_space<vmem>>, %arg5: memref<1x64xf32, #tpu.memory_space<vmem>>, %arg6: memref<1x64xf32, #tpu.memory_space<vmem>>, %arg7: memref<1x64xf32, #tpu.memory_space<vmem>>, %arg8: memref<16x64xbf16, #tpu.memory_space<vmem>>) attributes {dimension_semantics = [#tpu.dimension_semantics<parallel>], iteration_bounds = array<i64: 1>, scalar_prefetch = 0 : i64, scratch_operands = 0 : i64, tpu.core_type = #tpu.core_type<tc>, window_params = [{transform_indices = @transform_0, window_bounds = array<i64: 16, 64>}, {pipeline_mode = #tpu.pipeline_mode<synchronous>, transform_indices = @transform_1, window_bounds = array<i64: 1, 64>}, {pipeline_mode = #tpu.pipeline_mode<synchronous>, transform_indices = @transform_2, window_bounds = array<i64: 1, 64>}, {pipeline_mode = #tpu.pipeline_mode<synchronous>, transform_indices = @transform_3, window_bounds = array<i64: 64, 64>}, {pipeline_mode = #tpu.pipeline_mode<synchronous>, transform_indices = @transform_4, window_bounds = array<i64: 1, 64>}, {pipeline_mode = #tpu.pipeline_mode<synchronous>, transform_indices = @transform_5, window_bounds = array<i64: 1, 64>}, {pipeline_mode = #tpu.pipeline_mode<synchronous>, transform_indices = @transform_6, window_bounds = array<i64: 1, 64>}, {transform_indices = @transform_7, window_bounds = array<i64: 16, 64>}]} {
    %c0 = arith.constant 0 : index
    %c0_0 = arith.constant 0 : index
    %0 = vector.load %arg1[%c0, %c0_0] : memref<16x64xbf16, #tpu.memory_space<vmem>>, vector<16x64xbf16>
    %1 = arith.extf %0 : vector<16x64xbf16> to vector<16x64xf32>
    %cst = arith.constant dense<0.000000e+00> : vector<16xf32>
    %2 = vector.multi_reduction <add>, %1, %cst [1] : vector<16x64xf32> to vector<16xf32>
    %3 = vector.shape_cast %2 : vector<16xf32> to vector<16x1xf32>
    %cst_1 = arith.constant 6.400000e+01 : f32
    %4 = vector.broadcast %cst_1 : f32 to vector<16x1xf32>
    %5 = arith.divf %3, %4 : vector<16x1xf32>
    %6 = vector.broadcast %5 : vector<16x1xf32> to vector<16x64xf32>
    %7 = arith.subf %1, %6 : vector<16x64xf32>
    %8 = arith.mulf %7, %7 : vector<16x64xf32>
    %cst_2 = arith.constant dense<0.000000e+00> : vector<16xf32>
    %9 = vector.multi_reduction <add>, %8, %cst_2 [1] : vector<16x64xf32> to vector<16xf32>
    %10 = vector.shape_cast %9 : vector<16xf32> to vector<16x1xf32>
    %cst_3 = arith.constant 6.400000e+01 : f32
    %11 = vector.broadcast %cst_3 : f32 to vector<16x1xf32>
    %12 = arith.divf %10, %11 : vector<16x1xf32>
    %cst_4 = arith.constant 9.99999974E-6 : f32
    %13 = vector.broadcast %cst_4 : f32 to vector<16x1xf32>
    %14 = arith.addf %12, %13 : vector<16x1xf32>
    %15 = math.rsqrt %14 : vector<16x1xf32>
    %16 = vector.broadcast %15 : vector<16x1xf32> to vector<16x64xf32>
    %17 = arith.mulf %7, %16 : vector<16x64xf32>
    %c0_5 = arith.constant 0 : index
    %c0_6 = arith.constant 0 : index
    %18 = vector.load %arg2[%c0_5, %c0_6] : memref<1x64xf32, #tpu.memory_space<vmem>>, vector<1x64xf32>
    %19 = vector.broadcast %18 : vector<1x64xf32> to vector<16x64xf32>
    %20 = arith.mulf %17, %19 : vector<16x64xf32>
    %c0_7 = arith.constant 0 : index
    %c0_8 = arith.constant 0 : index
    %21 = vector.load %arg3[%c0_7, %c0_8] : memref<1x64xf32, #tpu.memory_space<vmem>>, vector<1x64xf32>
    %22 = vector.broadcast %21 : vector<1x64xf32> to vector<16x64xf32>
    %23 = arith.addf %20, %22 : vector<16x64xf32>
    %24 = arith.truncf %23 : vector<16x64xf32> to vector<16x64xbf16>
    %c0_9 = arith.constant 0 : index
    %c0_10 = arith.constant 0 : index
    %25 = vector.load %arg4[%c0_9, %c0_10] : memref<64x64xbf16, #tpu.memory_space<vmem>>, vector<64x64xbf16>
    %cst_11 = arith.constant dense<0.000000e+00> : vector<16x64xf32>
    %26 = tpu.matmul %24, %25, %cst_11 {dimension_numbers = #tpu.dot_dimension_numbers<[1], [0], [0], [1], [0, 0, 1, 1], [], []>} : vector<16x64xbf16>, vector<64x64xbf16>, vector<16x64xf32> -> vector<16x64xf32>
    %c0_12 = arith.constant 0 : index
    %c0_13 = arith.constant 0 : index
    %27 = vector.load %arg5[%c0_12, %c0_13] : memref<1x64xf32, #tpu.memory_space<vmem>>, vector<1x64xf32>
    %28 = vector.broadcast %27 : vector<1x64xf32> to vector<16x64xf32>
    %29 = arith.addf %26, %28 : vector<16x64xf32>
    %cst_14 = arith.constant 0.000000e+00 : f32
    %30 = vector.broadcast %cst_14 : f32 to vector<16x64xf32>
    %31 = arith.maximumf %29, %30 : vector<16x64xf32>
    %cst_15 = arith.constant dense<0.000000e+00> : vector<16xf32>
    %32 = vector.multi_reduction <add>, %31, %cst_15 [1] : vector<16x64xf32> to vector<16xf32>
    %33 = vector.shape_cast %32 : vector<16xf32> to vector<16x1xf32>
    %cst_16 = arith.constant 6.400000e+01 : f32
    %34 = vector.broadcast %cst_16 : f32 to vector<16x1xf32>
    %35 = arith.divf %33, %34 : vector<16x1xf32>
    %36 = vector.broadcast %35 : vector<16x1xf32> to vector<16x64xf32>
    %37 = arith.subf %31, %36 : vector<16x64xf32>
    %38 = arith.mulf %37, %37 : vector<16x64xf32>
    %cst_17 = arith.constant dense<0.000000e+00> : vector<16xf32>
    %39 = vector.multi_reduction <add>, %38, %cst_17 [1] : vector<16x64xf32> to vector<16xf32>
    %40 = vector.shape_cast %39 : vector<16xf32> to vector<16x1xf32>
    %cst_18 = arith.constant 6.400000e+01 : f32
    %41 = vector.broadcast %cst_18 : f32 to vector<16x1xf32>
    %42 = arith.divf %40, %41 : vector<16x1xf32>
    %cst_19 = arith.constant 9.99999974E-6 : f32
    %43 = vector.broadcast %cst_19 : f32 to vector<16x1xf32>
    %44 = arith.addf %42, %43 : vector<16x1xf32>
    %45 = math.rsqrt %44 : vector<16x1xf32>
    %46 = vector.broadcast %45 : vector<16x1xf32> to vector<16x64xf32>
    %47 = arith.mulf %37, %46 : vector<16x64xf32>
    %c0_20 = arith.constant 0 : index
    %c0_21 = arith.constant 0 : index
    %48 = vector.load %arg6[%c0_20, %c0_21] : memref<1x64xf32, #tpu.memory_space<vmem>>, vector<1x64xf32>
    %49 = vector.broadcast %48 : vector<1x64xf32> to vector<16x64xf32>
    %50 = arith.mulf %47, %49 : vector<16x64xf32>
    %c0_22 = arith.constant 0 : index
    %c0_23 = arith.constant 0 : index
    %51 = vector.load %arg7[%c0_22, %c0_23] : memref<1x64xf32, #tpu.memory_space<vmem>>, vector<1x64xf32>
    %52 = vector.broadcast %51 : vector<1x64xf32> to vector<16x64xf32>
    %53 = arith.addf %50, %52 : vector<16x64xf32>
    %54 = arith.truncf %53 : vector<16x64xf32> to vector<16x64xbf16>
    %c0_24 = arith.constant 0 : index
    %c0_25 = arith.constant 0 : index
    %55 = vector.load %arg8[%c0_24, %c0_25] : memref<16x64xbf16, #tpu.memory_space<vmem>>, vector<16x64xbf16>
    tpu.vector_store %arg8[%c0_24, %c0_25], %54 {strides = array<i32>} : memref<16x64xbf16, #tpu.memory_space<vmem>>, vector<16x64xbf16>,
    return
  }
  func.func @transform_0(%arg0: i32) -> (i32, i32) {
    %c0_i32 = arith.constant 0 : i32
    %c0_i32_0 = arith.constant 0 : i32
    return %arg0, %c0_i32 : i32, i32
  }
  func.func @transform_1(%arg0: i32) -> (i32, i32) {
    %c0_i32 = arith.constant 0 : i32
    %c0_i32_0 = arith.constant 0 : i32
    %c0_i32_1 = arith.constant 0 : i32
    return %c0_i32, %c0_i32_0 : i32, i32
  }
  func.func @transform_2(%arg0: i32) -> (i32, i32) {
    %c0_i32 = arith.constant 0 : i32
    %c0_i32_0 = arith.constant 0 : i32
    %c0_i32_1 = arith.constant 0 : i32
    return %c0_i32, %c0_i32_0 : i32, i32
  }
  func.func @transform_3(%arg0: i32) -> (i32, i32) {
    %c0_i32 = arith.constant 0 : i32
    %c0_i32_0 = arith.constant 0 : i32
    %c0_i32_1 = arith.constant 0 : i32
    return %c0_i32, %c0_i32_0 : i32, i32
  }
  func.func @transform_4(%arg0: i32) -> (i32, i32) {
    %c0_i32 = arith.constant 0 : i32
    %c0_i32_0 = arith.constant 0 : i32
    %c0_i32_1 = arith.constant 0 : i32
    return %c0_i32, %c0_i32_0 : i32, i32
  }
  func.func @transform_5(%arg0: i32) -> (i32, i32) {
    %c0_i32 = arith.constant 0 : i32
    %c0_i32_0 = arith.constant 0 : i32
    %c0_i32_1 = arith.constant 0 : i32
    return %c0_i32, %c0_i32_0 : i32, i32
  }
  func.func @transform_6(%arg0: i32) -> (i32, i32) {
    %c0_i32 = arith.constant 0 : i32
    %c0_i32_0 = arith.constant 0 : i32
    %c0_i32_1 = arith.constant 0 : i32
    return %c0_i32, %c0_i32_0 : i32, i32
  }
  func.func @transform_7(%arg0: i32) -> (i32, i32) {
    %c0_i32 = arith.constant 0 : i32
    %c0_i32_0 = arith.constant 0 : i32
    return %arg0, %c0_i32 : i32, i32
  }
}

module attributes {stable_mosaic.version = 11 : i64} {
  func.func @_ln_linear_relu_ln_kernel(%arg0: i32, %arg1: memref<16x64xbf16, #tpu.memory_space<vmem>>, %arg2: memref<1x64xf32, #tpu.memory_space<vmem>>, %arg3: memref<1x64xf32, #tpu.memory_space<vmem>>, %arg4: memref<64x64xbf16, #tpu.memory_space<vmem>>, %arg5: memref<1x64xf32, #tpu.memory_space<vmem>>, %arg6: memref<1x64xf32, #tpu.memory_space<vmem>>, %arg7: memref<1x64xf32, #tpu.memory_space<vmem>>, %arg8: memref<16x64xf32, #tpu.memory_space<vmem>>) attributes {dimension_semantics = [#tpu.dimension_semantics<parallel>], iteration_bounds = array<i64: 1>, scalar_prefetch = 0 : i64, scratch_operands = 0 : i64, tpu.core_type = #tpu.core_type<tc>, window_params = [{transform_indices = @transform_0, window_bounds = array<i64: 16, 64>}, {pipeline_mode = #tpu.pipeline_mode<synchronous>, transform_indices = @transform_1, window_bounds = array<i64: 1, 64>}, {pipeline_mode = #tpu.pipeline_mode<synchronous>, transform_indices = @transform_2, window_bounds = array<i64: 1, 64>}, {pipeline_mode = #tpu.pipeline_mode<synchronous>, transform_indices = @transform_3, window_bounds = array<i64: 64, 64>}, {pipeline_mode = #tpu.pipeline_mode<synchronous>, transform_indices = @transform_4, window_bounds = array<i64: 1, 64>}, {pipeline_mode = #tpu.pipeline_mode<synchronous>, transform_indices = @transform_5, window_bounds = array<i64: 1, 64>}, {pipeline_mode = #tpu.pipeline_mode<synchronous>, transform_indices = @transform_6, window_bounds = array<i64: 1, 64>}, {transform_indices = @transform_7, window_bounds = array<i64: 16, 64>}]} {
    %c0 = arith.constant 0 : index
    %c0_0 = arith.constant 0 : index
    %0 = vector.load %arg1[%c0, %c0_0] : memref<16x64xbf16, #tpu.memory_space<vmem>>, vector<16x64xbf16>
    %1 = arith.extf %0 : vector<16x64xbf16> to vector<16x64xf32>
    %cst = arith.constant dense<0.000000e+00> : vector<16xf32>
    %2 = vector.multi_reduction <add>, %1, %cst [1] : vector<16x64xf32> to vector<16xf32>
    %3 = vector.shape_cast %2 : vector<16xf32> to vector<16x1xf32>
    %cst_1 = arith.constant 6.400000e+01 : f32
    %4 = vector.broadcast %cst_1 : f32 to vector<16x1xf32>
    %5 = arith.divf %3, %4 : vector<16x1xf32>
    %6 = vector.broadcast %5 : vector<16x1xf32> to vector<16x64xf32>
    %7 = arith.subf %1, %6 : vector<16x64xf32>
    %8 = arith.mulf %7, %7 : vector<16x64xf32>
    %cst_2 = arith.constant dense<0.000000e+00> : vector<16xf32>
    %9 = vector.multi_reduction <add>, %8, %cst_2 [1] : vector<16x64xf32> to vector<16xf32>
    %10 = vector.shape_cast %9 : vector<16xf32> to vector<16x1xf32>
    %cst_3 = arith.constant 6.400000e+01 : f32
    %11 = vector.broadcast %cst_3 : f32 to vector<16x1xf32>
    %12 = arith.divf %10, %11 : vector<16x1xf32>
    %cst_4 = arith.constant 9.99999974E-6 : f32
    %13 = vector.broadcast %cst_4 : f32 to vector<16x1xf32>
    %14 = arith.addf %12, %13 : vector<16x1xf32>
    %15 = math.rsqrt %14 : vector<16x1xf32>
    %16 = vector.broadcast %15 : vector<16x1xf32> to vector<16x64xf32>
    %17 = arith.mulf %7, %16 : vector<16x64xf32>
    %c0_5 = arith.constant 0 : index
    %c0_6 = arith.constant 0 : index
    %18 = vector.load %arg2[%c0_5, %c0_6] : memref<1x64xf32, #tpu.memory_space<vmem>>, vector<1x64xf32>
    %19 = vector.broadcast %18 : vector<1x64xf32> to vector<16x64xf32>
    %20 = arith.mulf %17, %19 : vector<16x64xf32>
    %c0_7 = arith.constant 0 : index
    %c0_8 = arith.constant 0 : index
    %21 = vector.load %arg3[%c0_7, %c0_8] : memref<1x64xf32, #tpu.memory_space<vmem>>, vector<1x64xf32>
    %22 = vector.broadcast %21 : vector<1x64xf32> to vector<16x64xf32>
    %23 = arith.addf %20, %22 : vector<16x64xf32>
    %24 = arith.truncf %23 : vector<16x64xf32> to vector<16x64xbf16>
    %c0_9 = arith.constant 0 : index
    %c0_10 = arith.constant 0 : index
    %25 = vector.load %arg4[%c0_9, %c0_10] : memref<64x64xbf16, #tpu.memory_space<vmem>>, vector<64x64xbf16>
    %cst_11 = arith.constant dense<0.000000e+00> : vector<16x64xf32>
    %26 = tpu.matmul %24, %25, %cst_11 {dimension_numbers = #tpu.dot_dimension_numbers<[1], [0], [0], [1], [0, 0, 1, 1], [], []>} : vector<16x64xbf16>, vector<64x64xbf16>, vector<16x64xf32> -> vector<16x64xf32>
    %c0_12 = arith.constant 0 : index
    %c0_13 = arith.constant 0 : index
    %27 = vector.load %arg5[%c0_12, %c0_13] : memref<1x64xf32, #tpu.memory_space<vmem>>, vector<1x64xf32>
    %28 = vector.broadcast %27 : vector<1x64xf32> to vector<16x64xf32>
    %29 = arith.addf %26, %28 : vector<16x64xf32>
    %cst_14 = arith.constant 0.000000e+00 : f32
    %30 = vector.broadcast %cst_14 : f32 to vector<16x64xf32>
    %31 = arith.maximumf %29, %30 : vector<16x64xf32>
    %cst_15 = arith.constant dense<0.000000e+00> : vector<16xf32>
    %32 = vector.multi_reduction <add>, %31, %cst_15 [1] : vector<16x64xf32> to vector<16xf32>
    %33 = vector.shape_cast %32 : vector<16xf32> to vector<16x1xf32>
    %cst_16 = arith.constant 6.400000e+01 : f32
    %34 = vector.broadcast %cst_16 : f32 to vector<16x1xf32>
    %35 = arith.divf %33, %34 : vector<16x1xf32>
    %36 = vector.broadcast %35 : vector<16x1xf32> to vector<16x64xf32>
    %37 = arith.subf %31, %36 : vector<16x64xf32>
    %38 = arith.mulf %37, %37 : vector<16x64xf32>
    %cst_17 = arith.constant dense<0.000000e+00> : vector<16xf32>
    %39 = vector.multi_reduction <add>, %38, %cst_17 [1] : vector<16x64xf32> to vector<16xf32>
    %40 = vector.shape_cast %39 : vector<16xf32> to vector<16x1xf32>
    %cst_18 = arith.constant 6.400000e+01 : f32
    %41 = vector.broadcast %cst_18 : f32 to vector<16x1xf32>
    %42 = arith.divf %40, %41 : vector<16x1xf32>
    %cst_19 = arith.constant 9.99999974E-6 : f32
    %43 = vector.broadcast %cst_19 : f32 to vector<16x1xf32>
    %44 = arith.addf %42, %43 : vector<16x1xf32>
    %45 = math.rsqrt %44 : vector<16x1xf32>
    %46 = vector.broadcast %45 : vector<16x1xf32> to vector<16x64xf32>
    %47 = arith.mulf %37, %46 : vector<16x64xf32>
    %c0_20 = arith.constant 0 : index
    %c0_21 = arith.constant 0 : index
    %48 = vector.load %arg6[%c0_20, %c0_21] : memref<1x64xf32, #tpu.memory_space<vmem>>, vector<1x64xf32>
    %49 = vector.broadcast %48 : vector<1x64xf32> to vector<16x64xf32>
    %50 = arith.mulf %47, %49 : vector<16x64xf32>
    %c0_22 = arith.constant 0 : index
    %c0_23 = arith.constant 0 : index
    %51 = vector.load %arg7[%c0_22, %c0_23] : memref<1x64xf32, #tpu.memory_space<vmem>>, vector<1x64xf32>
    %52 = vector.broadcast %51 : vector<1x64xf32> to vector<16x64xf32>
    %53 = arith.addf %50, %52 : vector<16x64xf32>
    %c0_24 = arith.constant 0 : index
    %c0_25 = arith.constant 0 : index
    %54 = vector.load %arg8[%c0_24, %c0_25] : memref<16x64xf32, #tpu.memory_space<vmem>>, vector<16x64xf32>
    tpu.vector_store %arg8[%c0_24, %c0_25], %53 {strides = array<i32>} : memref<16x64xf32, #tpu.memory_space<vmem>>, vector<16x64xf32>,
    return
  }
  func.func @transform_0(%arg0: i32) -> (i32, i32) {
    %c0_i32 = arith.constant 0 : i32
    %c0_i32_0 = arith.constant 0 : i32
    return %arg0, %c0_i32 : i32, i32
  }
  func.func @transform_1(%arg0: i32) -> (i32, i32) {
    %c0_i32 = arith.constant 0 : i32
    %c0_i32_0 = arith.constant 0 : i32
    %c0_i32_1 = arith.constant 0 : i32
    return %c0_i32, %c0_i32_0 : i32, i32
  }
  func.func @transform_2(%arg0: i32) -> (i32, i32) {
    %c0_i32 = arith.constant 0 : i32
    %c0_i32_0 = arith.constant 0 : i32
    %c0_i32_1 = arith.constant 0 : i32
    return %c0_i32, %c0_i32_0 : i32, i32
  }
  func.func @transform_3(%arg0: i32) -> (i32, i32) {
    %c0_i32 = arith.constant 0 : i32
    %c0_i32_0 = arith.constant 0 : i32
    %c0_i32_1 = arith.constant 0 : i32
    return %c0_i32, %c0_i32_0 : i32, i32
  }
  func.func @transform_4(%arg0: i32) -> (i32, i32) {
    %c0_i32 = arith.constant 0 : i32
    %c0_i32_0 = arith.constant 0 : i32
    %c0_i32_1 = arith.constant 0 : i32
    return %c0_i32, %c0_i32_0 : i32, i32
  }
  func.func @transform_5(%arg0: i32) -> (i32, i32) {
    %c0_i32 = arith.constant 0 : i32
    %c0_i32_0 = arith.constant 0 : i32
    %c0_i32_1 = arith.constant 0 : i32
    return %c0_i32, %c0_i32_0 : i32, i32
  }
  func.func @transform_6(%arg0: i32) -> (i32, i32) {
    %c0_i32 = arith.constant 0 : i32
    %c0_i32_0 = arith.constant 0 : i32
    %c0_i32_1 = arith.constant 0 : i32
    return %c0_i32, %c0_i32_0 : i32, i32
  }
  func.func @transform_7(%arg0: i32) -> (i32, i32) {
    %c0_i32 = arith.constant 0 : i32
    %c0_i32_0 = arith.constant 0 : i32
    return %arg0, %c0_i32 : i32, i32
  }
}

</mosaic_0001>

<llo_original>
// kernel: forward.5
$region0: #{forward.5}
  #allocation0 [shape = 'u32[]', space=smem, size = 0x4, offset = 0x4, fixed_abs, tag = 'smem constant byte address 0x4 - core index']
  #allocation1 [shape = 'u32[144,128]{1,0:T(1,128)}', space=vmem, size = 0x12000, scoped, tag = 'internal scratch']
  #allocation2 [shape = 'f32[16,64]{1,0:T(8,128)}', space=vmem, size = 0x2000, scoped, tag = 'scratch operand']
  %s0 = inlined_call_operand.vmem [shape: f32[16,16], index: 0, kind: input, shape index: {}]
  %s1 = inlined_call_operand.vmem [shape: bf16[16,64], index: 1, kind: input, shape index: {}]
  %s2 = inlined_call_operand.vmem [shape: f32[1,64], index: 2, kind: input, shape index: {}]
  %s3 = inlined_call_operand.vmem [shape: bf16[16,64], index: 3, kind: output, shape index: {}]
  %s4 = sld [smem:[#allocation0]]
  $region30: #{forward.5} parent=0
    _
  %s6 = ssub.s32 1, %s4
  %s7 = scalar_select 0, %s6, %s4
  // Predicated region
  $region2: #{forward.5} parent=0 // pred_check
    _
  $region3: #{forward.5} parent=0 // pred_check_branch
    %9 = sbr.rel (0) target = $region5
  $region4: #{forward.5} parent=0 // pred_region
    _
  $region5: #{forward.5} parent=0 // pred_fallthru
    _
  // Predicated region
  $region6: #{forward.5} parent=0 // pred_check
    _
  $region7: #{forward.5} parent=0 // pred_check_branch
    %11 = sbr.rel (0) target = $region9
  $region8: #{forward.5} parent=0 // pred_region
    _
  $region9: #{forward.5} parent=0 // pred_fallthru
    _
  // Predicated region
  $region10: #{forward.5} parent=0 // pred_check
    _
  $region11: #{forward.5} parent=0 // pred_check_branch
    %13 = sbr.rel (0) target = $region13
  $region12: #{forward.5} parent=0 // pred_region
    _
  $region13: #{forward.5} parent=0 // pred_fallthru
    _
  %p15 = scmp.eq.s32.totalorder 0, 0
  // Predicated region
  $region14: #{forward.5} parent=0 // pred_check
    %p16 = pneg %p15
  $region15: #{forward.5} parent=0 // pred_check_branch
    %18 = sbr.rel (%p16) target = $region17
  $region16: #{forward.5} parent=0 // pred_region
    %vm19 = vcmask 523264
    %20 = vst.msk [vmem:[#allocation2] sm:$0xff] %vm19, 0.0
    %21 = vst.msk [vmem:[#allocation2 + $0x8] sm:$0xff] %vm19, 0.0
  $region17: #{forward.5} parent=0 // pred_fallthru
    _
  %v22 = vld [vmem:[#allocation2] sm:$0xff]
  %v23 = vld [vmem:[#allocation2 + $0x8] sm:$0xff]
  %v24 = vld [vmem:[%s0] sm:$0xff]
  %v25 = vld [vmem:[%s0 + $0x8] sm:$0xff]
  %v26 = vpack.c.bf16 %v25, %v24
  %v27 = vld [vmem:[%s1] sm:$0xf]
  %v28 = vld [vmem:[%s1 + $0x4] sm:$0xf]
  %v31 = vunpack.c.l.b16 %v27
  %v32 = vunpack.c.l.b16 %v28
  %v33 = vpack.c.b16 %v32, %v31
  %vm35 = vcmask 130048
  %v37 = vsel %vm35, %v26, 0
  %39 = vmatprep.subr.bf16.mxu0 0
  %40 = vmatpush1.bf16.msra.mxu0 %v33
  %41 = vmatprep.subr.bf16.mxu0 0
  %42 = vmatpush1.bf16.msra.mxu0 0
  %43 = vmatprep.subr.bf16.mxu0 0
  %44 = vmatpush1.bf16.msra.mxu0 0
  %45 = vmatprep.subr.bf16.mxu0 0
  %46 = vmatpush1.bf16.msra.mxu0 0
  %47 = vmatprep.subr.bf16.mxu0 0
  %48 = vmatpush1.bf16.msra.mxu0 0
  %49 = vmatprep.subr.bf16.mxu0 0
  %50 = vmatpush1.bf16.msra.mxu0 0
  %51 = vmatprep.subr.bf16.mxu0 0
  %52 = vmatpush1.bf16.msra.mxu0 0
  %53 = vmatprep.subr.bf16.mxu0 0
  %54 = vmatpush1.bf16.msra.mxu0 0
  %55 = vmatprep.subr.bf16.mxu0 0
  %56 = vmatpush1.bf16.msra.mxu0 0
  %57 = vmatprep.subr.bf16.mxu0 0
  %58 = vmatpush1.bf16.msra.mxu0 0
  %59 = vmatprep.subr.bf16.mxu0 0
  %60 = vmatpush1.bf16.msra.mxu0 0
  %61 = vmatprep.subr.bf16.mxu0 0
  %62 = vmatpush1.bf16.msra.mxu0 0
  %63 = vmatprep.subr.bf16.mxu0 0
  %64 = vmatpush1.bf16.msra.mxu0 0
  %65 = vmatprep.subr.bf16.mxu0 0
  %66 = vmatpush1.bf16.msra.mxu0 0
  %67 = vmatprep.subr.bf16.mxu0 0
  %68 = vmatpush1.bf16.msra.mxu0 0
  %69 = vmatprep.subr.bf16.mxu0 0
  %70 = vmatpush1.bf16.msra.mxu0 0
  %71 = vmatprep.mubr.bf16.mxu0 0
  %72 = vmatmul.mubr.bf16.gmra.mrb[0].mxu0 %v37
  %v73 = vpop.f32.mrb[0].mxu0
  %v74 = vadd.f32 0.0, %v73
  %v75 = vpop.f32.mrb[0].mxu0
  %v76 = vpop.f32.mrb[0].mxu0
  %v77 = vadd.f32 0.0, %v76
  %v78 = vpop.f32.mrb[0].mxu0
  %79 = vdwg.mxu0
  %v80 = vadd.f32 %v22, %v74
  %v81 = vadd.f32 %v23, %v77
  %vm82 = vcmask 523264
  %83 = vst.msk [vmem:[#allocation2] sm:$0xff] %vm82, %v80
  %84 = vst.msk [vmem:[#allocation2 + $0x8] sm:$0xff] %vm82, %v81
  // Predicated region
  $region18: #{forward.5} parent=0 // pred_check
    %p85 = pneg %p15
  $region19: #{forward.5} parent=0 // pred_check_branch
    %87 = sbr.rel (%p85) target = $region21
  $region20: #{forward.5} parent=0 // pred_region
    %v88 = vld [vmem:[#allocation2] sm:$0xff]
    %v89 = vld [vmem:[#allocation2 + $0x8] sm:$0xff]
    %v90 = vld [vmem:[%s2] sm:$0x1]
    %v92 = vlaneseq
    %v93 = vshrl.u32 %v92, 7
    %v94 = vsub.s32 0, %v93
    %v95 = vrot.slane %v90, %v94
    %v97 = vadd.f32 %v88, %v95
    %v98 = vadd.f32 %v89, %v95
    %v99 = vpack.c.bf16 %v98, %v97
    %v101 = vunpack.c.l.b16 %v99
    %v102 = vunpack.c.h.b16 %v99
    %v103 = vpack.c.b16 %v101, %v101
    %v104 = vpack.c.b16 %v102, %v102
    %vm107 = vcmask 519168
    %108 = vst.msk [vmem:[%s3] sm:$0xf] %vm107, %v103
    %109 = vst.msk [vmem:[%s3 + $0x4] sm:$0xf] %vm107, %v104
  $region21: #{forward.5} parent=0 // pred_fallthru
    _
  // Predicated region
  $region22: #{forward.5} parent=0 // pred_check
    _
  $region23: #{forward.5} parent=0 // pred_check_branch
    %111 = sbr.rel (0) target = $region25
  $region24: #{forward.5} parent=0 // pred_region
    _
  $region25: #{forward.5} parent=0 // pred_fallthru
    _
  // Predicated region
  $region26: #{forward.5} parent=0 // pred_check
    _
  $region27: #{forward.5} parent=0 // pred_check_branch
    %113 = sbr.rel (0) target = $region29
  $region28: #{forward.5} parent=0 // pred_region
    _
  $region29: #{forward.5} parent=0 // pred_fallthru
    _

// kernel: forward.6
$region0: #{forward.6}
  #allocation0 [shape = 'u32[]', space=smem, size = 0x4, offset = 0x4, fixed_abs, tag = 'smem constant byte address 0x4 - core index']
  #allocation1 [shape = 'u32[144,128]{1,0:T(1,128)}', space=vmem, size = 0x12000, scoped, tag = 'internal scratch']
  #allocation2 [shape = 'f32[8,64]{1,0:T(8,128)}', space=vmem, size = 0x1000, scoped, tag = 'scratch operand']
  #allocation3 [shape = 'f32[8,16]{1,0:T(8,128)}', space=vmem, size = 0x1000, scoped, tag = 'scratch operand']
  #allocation4 [shape = 'f32[8,16]{1,0:T(8,128)}', space=vmem, size = 0x1000, scoped, tag = 'scratch operand']
  %s0 = inlined_call_operand.vmem [shape: bf16[2,8,64], index: 0, kind: input, shape index: {}]
  %s1 = inlined_call_operand.vmem [shape: bf16[4,64,16], index: 1, kind: input, shape index: {}]
  %s2 = inlined_call_operand.vmem [shape: f32[4,1,16], index: 2, kind: input, shape index: {}]
  %s3 = inlined_call_operand.vmem [shape: bf16[4,64,16], index: 3, kind: input, shape index: {}]
  %s4 = inlined_call_operand.vmem [shape: f32[4,1,16], index: 4, kind: input, shape index: {}]
  %s5 = inlined_call_operand.vmem [shape: bf16[4,64,16], index: 5, kind: input, shape index: {}]
  %s6 = inlined_call_operand.vmem [shape: f32[4,1,16], index: 6, kind: input, shape index: {}]
  %s7 = inlined_call_operand.vmem [shape: f32[4,8,8], index: 7, kind: input, shape index: {}]
  %s8 = inlined_call_operand.vmem [shape: f32[4,8,8], index: 8, kind: input, shape index: {}]
  %s9 = inlined_call_operand.vmem [shape: bf16[4,16,64], index: 9, kind: input, shape index: {}]
  %s10 = inlined_call_operand.vmem [shape: f32[1,64], index: 10, kind: input, shape index: {}]
  %s11 = inlined_call_operand.vmem [shape: bf16[2,8,64], index: 11, kind: output, shape index: {}]
  %s12 = sld [smem:[#allocation0]]
  $region85: #{forward.6} parent=0
    _
  %s14 = ssub.s32 1, %s12
  %s15 = scalar_select 0, %s14, %s12
  loop: start=0, step=1, limit=10
  $region2: #{forward.6} parent=0 // loop_pre_header
    _
  $region3: #{forward.6} parent=0 // loop_header
    %s17 = sphi 0, %s21
    %p18 = scmp.ge.s32.totalorder %s17, 10
    %s24 = sphi 0, %s43
    %s25 = sphi 0, %s39
    %s26 = sphi 0, %s35
    %s27 = sphi 0, %s24
    %s28 = sphi 0, %s25
    %s29 = sphi 0, %s26
    %s30 = sphi 0, %s27
    %s31 = sphi 0, %s28
    %s32 = sphi 0, %s29
    %s46 = sphi 0, %s48
    %s49 = sphi 0, %s46
    %s50 = sphi 0, %s49
    %s66 = sphi 0, %s50
    %s72 = sphi 0, %s74
    %s75 = sphi 0, %s72
    %s76 = sphi 0, %s75
    %s92 = sphi 0, %s76
    %s98 = sphi 0, %s100
    %s101 = sphi 0, %s98
    %s102 = sphi 0, %s101
    %s118 = sphi 0, %s102
    %s124 = sphi 0, %s126
    %s127 = sphi 0, %s124
    %s128 = sphi 0, %s127
    %s144 = sphi 0, %s128
    %s150 = sphi 0, %s152
    %s153 = sphi 0, %s150
    %s154 = sphi 0, %s153
    %s170 = sphi 0, %s154
    %s176 = sphi 0, %s178
    %s179 = sphi 0, %s176
    %s180 = sphi 0, %s179
    %s196 = sphi 0, %s180
    %s202 = sphi 0, %s204
    %s205 = sphi 0, %s202
    %s206 = sphi 0, %s205
    %s222 = sphi 0, %s206
    %s228 = sphi 0, %s230
    %s231 = sphi 0, %s228
    %s232 = sphi 0, %s231
    %s248 = sphi 0, %s232
    %s254 = sphi 0, %s256
    %s257 = sphi 0, %s254
    %s258 = sphi 0, %s257
    %s274 = sphi 0, %s258
    %s280 = sphi 0, %s282
    %s283 = sphi 0, %s280
    %s284 = sphi 0, %s283
    %s300 = sphi 0, %s284
    %s304 = sphi 0, %s304
    %s306 = sphi 0, %s304
    %s307 = sphi 0, %s306
    %s321 = sphi 0, %s307
    %s329 = sphi 0, %s331
    %s332 = sphi 0, %s329
    %s333 = sphi 0, %s332
    %s349 = sphi 0, %s333
  $region4: #{forward.6} parent=0 // loop_header_branch
    %20 = sbr.rel (%p18) target = $region8
  $region5: #{forward.6} parent=0 // loop_body
    %s22 = ssub.s32 %s17, 1
    %s23 = ssub.s32 %s17, 2
    %s33 = sadd.s32 1, %s26
    %p34 = scmp.ge.s32.totalorder %s33, 4
    %s35 = scalar_select %p34, 0, %s33
    %s36 = sadd.s32 1, %s25
    %s37 = scalar_select %p34, %s36, %s25
    %p38 = scmp.ge.s32.totalorder %s37, 1
    %s39 = scalar_select %p38, 0, %s37
    %s40 = sadd.s32 1, %s24
    %s41 = scalar_select %p38, %s40, %s24
    %p42 = scmp.ge.s32.totalorder %s41, 2
    %s43 = scalar_select %p42, 0, %s41
    %s44 = ssub.s32 %s24, %s43
    %p45 = scmp.eq.s32.totalorder %s44, 0
    %s47 = sadd.s32 %s46, 1
    %s48 = scalar_select %p45, %s46, %s47
    %p51 = pneg %p45
    %p52 = scmp.eq.s32.totalorder %s17, 7
    %p53 = por %p51, %p52
    %p54 = scmp.ne.s32.totalorder %s46, %s49
    %p55 = scmp.eq.s32.totalorder %s17, 0
    %p56 = por %p54, %p55
    %p57 = scmp.ne.s32.totalorder %s46, %s49
    %p58 = scmp.eq.s32.totalorder %s22, 7
    %p59 = por %p57, %p58
    %p60 = scmp.ne.s32.totalorder %s49, %s50
    %p61 = scmp.eq.s32.totalorder %s22, 0
    %p62 = por %p60, %p61
    %p63 = scmp.ne.s32.totalorder %s49, %s50
    %p64 = scmp.eq.s32.totalorder %s23, 7
    %p65 = por %p63, %p64
    %p67 = scmp.ne.s32.totalorder %s50, %s66
    %p68 = scmp.eq.s32.totalorder %s23, 0
    %p69 = por %p67, %p68
    %s70 = ssub.s32 %s26, %s35
    %p71 = scmp.eq.s32.totalorder %s70, 0
    %s73 = sadd.s32 %s72, 1
    %s74 = scalar_select %p71, %s72, %s73
    %p77 = pneg %p71
    %p78 = scmp.eq.s32.totalorder %s17, 7
    %p79 = por %p77, %p78
    %p80 = scmp.ne.s32.totalorder %s72, %s75
    %p81 = scmp.eq.s32.totalorder %s17, 0
    %p82 = por %p80, %p81
    %p83 = scmp.ne.s32.totalorder %s72, %s75
    %p84 = scmp.eq.s32.totalorder %s22, 7
    %p85 = por %p83, %p84
    %p86 = scmp.ne.s32.totalorder %s75, %s76
    %p87 = scmp.eq.s32.totalorder %s22, 0
    %p88 = por %p86, %p87
    %p89 = scmp.ne.s32.totalorder %s75, %s76
    %p90 = scmp.eq.s32.totalorder %s23, 7
    %p91 = por %p89, %p90
    %p93 = scmp.ne.s32.totalorder %s76, %s92
    %p94 = scmp.eq.s32.totalorder %s23, 0
    %p95 = por %p93, %p94
    %s96 = ssub.s32 %s26, %s35
    %p97 = scmp.eq.s32.totalorder %s96, 0
    %s99 = sadd.s32 %s98, 1
    %s100 = scalar_select %p97, %s98, %s99
    %p103 = pneg %p97
    %p104 = scmp.eq.s32.totalorder %s17, 7
    %p105 = por %p103, %p104
    %p106 = scmp.ne.s32.totalorder %s98, %s101
    %p107 = scmp.eq.s32.totalorder %s17, 0
    %p108 = por %p106, %p107
    %p109 = scmp.ne.s32.totalorder %s98, %s101
    %p110 = scmp.eq.s32.totalorder %s22, 7
    %p111 = por %p109, %p110
    %p112 = scmp.ne.s32.totalorder %s101, %s102
    %p113 = scmp.eq.s32.totalorder %s22, 0
    %p114 = por %p112, %p113
    %p115 = scmp.ne.s32.totalorder %s101, %s102
    %p116 = scmp.eq.s32.totalorder %s23, 7
    %p117 = por %p115, %p116
    %p119 = scmp.ne.s32.totalorder %s102, %s118
    %p120 = scmp.eq.s32.totalorder %s23, 0
    %p121 = por %p119, %p120
    %s122 = ssub.s32 %s26, %s35
    %p123 = scmp.eq.s32.totalorder %s122, 0
    %s125 = sadd.s32 %s124, 1
    %s126 = scalar_select %p123, %s124, %s125
    %p129 = pneg %p123
    %p130 = scmp.eq.s32.totalorder %s17, 7
    %p131 = por %p129, %p130
    %p132 = scmp.ne.s32.totalorder %s124, %s127
    %p133 = scmp.eq.s32.totalorder %s17, 0
    %p134 = por %p132, %p133
    %p135 = scmp.ne.s32.totalorder %s124, %s127
    %p136 = scmp.eq.s32.totalorder %s22, 7
    %p137 = por %p135, %p136
    %p138 = scmp.ne.s32.totalorder %s127, %s128
    %p139 = scmp.eq.s32.totalorder %s22, 0
    %p140 = por %p138, %p139
    %p141 = scmp.ne.s32.totalorder %s127, %s128
    %p142 = scmp.eq.s32.totalorder %s23, 7
    %p143 = por %p141, %p142
    %p145 = scmp.ne.s32.totalorder %s128, %s144
    %p146 = scmp.eq.s32.totalorder %s23, 0
    %p147 = por %p145, %p146
    %s148 = ssub.s32 %s26, %s35
    %p149 = scmp.eq.s32.totalorder %s148, 0
    %s151 = sadd.s32 %s150, 1
    %s152 = scalar_select %p149, %s150, %s151
    %p155 = pneg %p149
    %p156 = scmp.eq.s32.totalorder %s17, 7
    %p157 = por %p155, %p156
    %p158 = scmp.ne.s32.totalorder %s150, %s153
    %p159 = scmp.eq.s32.totalorder %s17, 0
    %p160 = por %p158, %p159
    %p161 = scmp.ne.s32.totalorder %s150, %s153
    %p162 = scmp.eq.s32.totalorder %s22, 7
    %p163 = por %p161, %p162
    %p164 = scmp.ne.s32.totalorder %s153, %s154
    %p165 = scmp.eq.s32.totalorder %s22, 0
    %p166 = por %p164, %p165
    %p167 = scmp.ne.s32.totalorder %s153, %s154
    %p168 = scmp.eq.s32.totalorder %s23, 7
    %p169 = por %p167, %p168
    %p171 = scmp.ne.s32.totalorder %s154, %s170
    %p172 = scmp.eq.s32.totalorder %s23, 0
    %p173 = por %p171, %p172
    %s174 = ssub.s32 %s26, %s35
    %p175 = scmp.eq.s32.totalorder %s174, 0
    %s177 = sadd.s32 %s176, 1
    %s178 = scalar_select %p175, %s176, %s177
    %p181 = pneg %p175
    %p182 = scmp.eq.s32.totalorder %s17, 7
    %p183 = por %p181, %p182
    %p184 = scmp.ne.s32.totalorder %s176, %s179
    %p185 = scmp.eq.s32.totalorder %s17, 0
    %p186 = por %p184, %p185
    %p187 = scmp.ne.s32.totalorder %s176, %s179
    %p188 = scmp.eq.s32.totalorder %s22, 7
    %p189 = por %p187, %p188
    %p190 = scmp.ne.s32.totalorder %s179, %s180
    %p191 = scmp.eq.s32.totalorder %s22, 0
    %p192 = por %p190, %p191
    %p193 = scmp.ne.s32.totalorder %s179, %s180
    %p194 = scmp.eq.s32.totalorder %s23, 7
    %p195 = por %p193, %p194
    %p197 = scmp.ne.s32.totalorder %s180, %s196
    %p198 = scmp.eq.s32.totalorder %s23, 0
    %p199 = por %p197, %p198
    %s200 = ssub.s32 %s26, %s35
    %p201 = scmp.eq.s32.totalorder %s200, 0
    %s203 = sadd.s32 %s202, 1
    %s204 = scalar_select %p201, %s202, %s203
    %p207 = pneg %p201
    %p208 = scmp.eq.s32.totalorder %s17, 7
    %p209 = por %p207, %p208
    %p210 = scmp.ne.s32.totalorder %s202, %s205
    %p211 = scmp.eq.s32.totalorder %s17, 0
    %p212 = por %p210, %p211
    %p213 = scmp.ne.s32.totalorder %s202, %s205
    %p214 = scmp.eq.s32.totalorder %s22, 7
    %p215 = por %p213, %p214
    %p216 = scmp.ne.s32.totalorder %s205, %s206
    %p217 = scmp.eq.s32.totalorder %s22, 0
    %p218 = por %p216, %p217
    %p219 = scmp.ne.s32.totalorder %s205, %s206
    %p220 = scmp.eq.s32.totalorder %s23, 7
    %p221 = por %p219, %p220
    %p223 = scmp.ne.s32.totalorder %s206, %s222
    %p224 = scmp.eq.s32.totalorder %s23, 0
    %p225 = por %p223, %p224
    %s226 = ssub.s32 %s26, %s35
    %p227 = scmp.eq.s32.totalorder %s226, 0
    %s229 = sadd.s32 %s228, 1
    %s230 = scalar_select %p227, %s228, %s229
    %p233 = pneg %p227
    %p234 = scmp.eq.s32.totalorder %s17, 7
    %p235 = por %p233, %p234
    %p236 = scmp.ne.s32.totalorder %s228, %s231
    %p237 = scmp.eq.s32.totalorder %s17, 0
    %p238 = por %p236, %p237
    %p239 = scmp.ne.s32.totalorder %s228, %s231
    %p240 = scmp.eq.s32.totalorder %s22, 7
    %p241 = por %p239, %p240
    %p242 = scmp.ne.s32.totalorder %s231, %s232
    %p243 = scmp.eq.s32.totalorder %s22, 0
    %p244 = por %p242, %p243
    %p245 = scmp.ne.s32.totalorder %s231, %s232
    %p246 = scmp.eq.s32.totalorder %s23, 7
    %p247 = por %p245, %p246
    %p249 = scmp.ne.s32.totalorder %s232, %s248
    %p250 = scmp.eq.s32.totalorder %s23, 0
    %p251 = por %p249, %p250
    %s252 = ssub.s32 %s26, %s35
    %p253 = scmp.eq.s32.totalorder %s252, 0
    %s255 = sadd.s32 %s254, 1
    %s256 = scalar_select %p253, %s254, %s255
    %p259 = pneg %p253
    %p260 = scmp.eq.s32.totalorder %s17, 7
    %p261 = por %p259, %p260
    %p262 = scmp.ne.s32.totalorder %s254, %s257
    %p263 = scmp.eq.s32.totalorder %s17, 0
    %p264 = por %p262, %p263
    %p265 = scmp.ne.s32.totalorder %s254, %s257
    %p266 = scmp.eq.s32.totalorder %s22, 7
    %p267 = por %p265, %p266
    %p268 = scmp.ne.s32.totalorder %s257, %s258
    %p269 = scmp.eq.s32.totalorder %s22, 0
    %p270 = por %p268, %p269
    %p271 = scmp.ne.s32.totalorder %s257, %s258
    %p272 = scmp.eq.s32.totalorder %s23, 7
    %p273 = por %p271, %p272
    %p275 = scmp.ne.s32.totalorder %s258, %s274
    %p276 = scmp.eq.s32.totalorder %s23, 0
    %p277 = por %p275, %p276
    %s278 = ssub.s32 %s26, %s35
    %p279 = scmp.eq.s32.totalorder %s278, 0
    %s281 = sadd.s32 %s280, 1
    %s282 = scalar_select %p279, %s280, %s281
    %p285 = pneg %p279
    %p286 = scmp.eq.s32.totalorder %s17, 7
    %p287 = por %p285, %p286
    %p288 = scmp.ne.s32.totalorder %s280, %s283
    %p289 = scmp.eq.s32.totalorder %s17, 0
    %p290 = por %p288, %p289
    %p291 = scmp.ne.s32.totalorder %s280, %s283
    %p292 = scmp.eq.s32.totalorder %s22, 7
    %p293 = por %p291, %p292
    %p294 = scmp.ne.s32.totalorder %s283, %s284
    %p295 = scmp.eq.s32.totalorder %s22, 0
    %p296 = por %p294, %p295
    %p297 = scmp.ne.s32.totalorder %s283, %s284
    %p298 = scmp.eq.s32.totalorder %s23, 7
    %p299 = por %p297, %p298
    %p301 = scmp.ne.s32.totalorder %s284, %s300
    %p302 = scmp.eq.s32.totalorder %s23, 0
    %p303 = por %p301, %p302
    %s305 = sadd.s32 %s304, 1
    %p308 = scmp.eq.s32.totalorder %s17, 7
    %p309 = scmp.ne.s32.totalorder %s304, %s306
    %p310 = scmp.eq.s32.totalorder %s17, 0
    %p311 = por %p309, %p310
    %p312 = scmp.ne.s32.totalorder %s304, %s306
    %p313 = scmp.eq.s32.totalorder %s22, 7
    %p314 = por %p312, %p313
    %p315 = scmp.ne.s32.totalorder %s306, %s307
    %p316 = scmp.eq.s32.totalorder %s22, 0
    %p317 = por %p315, %p316
    %p318 = scmp.ne.s32.totalorder %s306, %s307
    %p319 = scmp.eq.s32.totalorder %s23, 7
    %p320 = por %p318, %p319
    %p322 = scmp.ne.s32.totalorder %s307, %s321
    %p323 = scmp.eq.s32.totalorder %s23, 0
    %p324 = por %p322, %p323
    %s325 = ssub.s32 %s24, %s43
    %s326 = ssub.s32 %s25, %s39
    %s327 = sor.u32 %s325, %s326
    %p328 = scmp.eq.s32.totalorder %s327, 0
    %s330 = sadd.s32 %s329, 1
    %s331 = scalar_select %p328, %s329, %s330
    %p334 = pneg %p328
    %p335 = scmp.eq.s32.totalorder %s17, 7
    %p336 = por %p334, %p335
    %p337 = scmp.ne.s32.totalorder %s329, %s332
    %p338 = scmp.eq.s32.totalorder %s17, 0
    %p339 = por %p337, %p338
    %p340 = scmp.ne.s32.totalorder %s329, %s332
    %p341 = scmp.eq.s32.totalorder %s22, 7
    %p342 = por %p340, %p341
    %p343 = scmp.ne.s32.totalorder %s332, %s333
    %p344 = scmp.eq.s32.totalorder %s22, 0
    %p345 = por %p343, %p344
    %p346 = scmp.ne.s32.totalorder %s332, %s333
    %p347 = scmp.eq.s32.totalorder %s23, 7
    %p348 = por %p346, %p347
    %p350 = scmp.ne.s32.totalorder %s333, %s349
    %p351 = scmp.eq.s32.totalorder %s23, 0
    %p352 = por %p350, %p351
    %p353 = scmp.le.s32.totalorder 1, %s17
    %p354 = scmp.lt.s32.totalorder %s17, 9
    %p355 = pnand %p353, %p354
    %p356 = pneg %p355
    // Predicated region
    $region9: #{forward.6} parent=5 // pred_check
      _
    $region10: #{forward.6} parent=5 // pred_check_branch
      %358 = sbr.rel (%p355) target = $region12
    $region11: #{forward.6} parent=5 // pred_region
      %s359 = ssub.s32 %s17, 1
      // Predicated region
      $region13: #{forward.6} parent=11 // pred_check
        %p360 = pneg %p317
      $region14: #{forward.6} parent=11 // pred_check_branch
        %362 = sbr.rel (%p360) target = $region16
      $region15: #{forward.6} parent=11 // pred_region
        _
      $region16: #{forward.6} parent=11 // pred_fallthru
        _
    $region12: #{forward.6} parent=5 // pred_fallthru
      _
    %p363 = scmp.lt.s32.totalorder %s17, 8
    // Predicated region
    $region17: #{forward.6} parent=5 // pred_check
      %p364 = pneg %p363
    $region18: #{forward.6} parent=5 // pred_check_branch
      %366 = sbr.rel (%p364) target = $region20
    $region19: #{forward.6} parent=5 // pred_region
      // Predicated region
      $region21: #{forward.6} parent=19 // pred_check
        %p367 = pneg %p56
      $region22: #{forward.6} parent=19 // pred_check_branch
        %369 = sbr.rel (%p367) target = $region24
      $region23: #{forward.6} parent=19 // pred_region
        %p370 = scmp.lt.s32.totalorder %s24, 1
        %s371 = scalar_select %p370, %s24, 1
        %s372 = smul.addr %s371, 4
        %s373 = scalar_lea.vmem %s0, %s372
      $region24: #{forward.6} parent=19 // pred_fallthru
        _
      // Predicated region
      $region25: #{forward.6} parent=19 // pred_check
        %p374 = pneg %p82
      $region26: #{forward.6} parent=19 // pred_check_branch
        %376 = sbr.rel (%p374) target = $region28
      $region27: #{forward.6} parent=19 // pred_region
        %p377 = scmp.lt.s32.totalorder %s26, 3
        %s378 = scalar_select %p377, %s26, 3
        %s379 = smul.addr %s378, 8
        %s380 = smul.addr %s379, 4
        %s381 = scalar_lea.vmem %s1, %s380
      $region28: #{forward.6} parent=19 // pred_fallthru
        _
      // Predicated region
      $region29: #{forward.6} parent=19 // pred_check
        %p382 = pneg %p108
      $region30: #{forward.6} parent=19 // pred_check_branch
        %384 = sbr.rel (%p382) target = $region32
      $region31: #{forward.6} parent=19 // pred_region
        %p385 = scmp.lt.s32.totalorder %s26, 3
        %s386 = scalar_select %p385, %s26, 3
        %s387 = scalar_lea.vmem %s2, %s386
      $region32: #{forward.6} parent=19 // pred_fallthru
        _
      // Predicated region
      $region33: #{forward.6} parent=19 // pred_check
        %p388 = pneg %p134
      $region34: #{forward.6} parent=19 // pred_check_branch
        %390 = sbr.rel (%p388) target = $region36
      $region35: #{forward.6} parent=19 // pred_region
        %p391 = scmp.lt.s32.totalorder %s26, 3
        %s392 = scalar_select %p391, %s26, 3
        %s393 = smul.addr %s392, 8
        %s394 = smul.addr %s393, 4
        %s395 = scalar_lea.vmem %s3, %s394
      $region36: #{forward.6} parent=19 // pred_fallthru
        _
      // Predicated region
      $region37: #{forward.6} parent=19 // pred_check
        %p396 = pneg %p160
      $region38: #{forward.6} parent=19 // pred_check_branch
        %398 = sbr.rel (%p396) target = $region40
      $region39: #{forward.6} parent=19 // pred_region
        %p399 = scmp.lt.s32.totalorder %s26, 3
        %s400 = scalar_select %p399, %s26, 3
        %s401 = scalar_lea.vmem %s4, %s400
      $region40: #{forward.6} parent=19 // pred_fallthru
        _
      // Predicated region
      $region41: #{forward.6} parent=19 // pred_check
        %p402 = pneg %p186
      $region42: #{forward.6} parent=19 // pred_check_branch
        %404 = sbr.rel (%p402) target = $region44
      $region43: #{forward.6} parent=19 // pred_region
        %p405 = scmp.lt.s32.totalorder %s26, 3
        %s406 = scalar_select %p405, %s26, 3
        %s407 = smul.addr %s406, 8
        %s408 = smul.addr %s407, 4
        %s409 = scalar_lea.vmem %s5, %s408
      $region44: #{forward.6} parent=19 // pred_fallthru
        _
      // Predicated region
      $region45: #{forward.6} parent=19 // pred_check
        %p410 = pneg %p212
      $region46: #{forward.6} parent=19 // pred_check_branch
        %412 = sbr.rel (%p410) target = $region48
      $region47: #{forward.6} parent=19 // pred_region
        %p413 = scmp.lt.s32.totalorder %s26, 3
        %s414 = scalar_select %p413, %s26, 3
        %s415 = scalar_lea.vmem %s6, %s414
      $region48: #{forward.6} parent=19 // pred_fallthru
        _
      // Predicated region
      $region49: #{forward.6} parent=19 // pred_check
        %p416 = pneg %p238
      $region50: #{forward.6} parent=19 // pred_check_branch
        %418 = sbr.rel (%p416) target = $region52
      $region51: #{forward.6} parent=19 // pred_region
        %p419 = scmp.lt.s32.totalorder %s26, 3
        %s420 = scalar_select %p419, %s26, 3
        %s421 = smul.addr %s420, 8
        %s422 = scalar_lea.vmem %s7, %s421
      $region52: #{forward.6} parent=19 // pred_fallthru
        _
      // Predicated region
      $region53: #{forward.6} parent=19 // pred_check
        %p423 = pneg %p264
      $region54: #{forward.6} parent=19 // pred_check_branch
        %425 = sbr.rel (%p423) target = $region56
      $region55: #{forward.6} parent=19 // pred_region
        %p426 = scmp.lt.s32.totalorder %s26, 3
        %s427 = scalar_select %p426, %s26, 3
        %s428 = smul.addr %s427, 8
        %s429 = scalar_lea.vmem %s8, %s428
      $region56: #{forward.6} parent=19 // pred_fallthru
        _
      // Predicated region
      $region57: #{forward.6} parent=19 // pred_check
        %p430 = pneg %p290
      $region58: #{forward.6} parent=19 // pred_check_branch
        %432 = sbr.rel (%p430) target = $region60
      $region59: #{forward.6} parent=19 // pred_region
        %p433 = scmp.lt.s32.totalorder %s26, 3
        %s434 = scalar_select %p433, %s26, 3
        %s435 = smul.addr %s434, 2
        %s436 = smul.addr %s435, 4
        %s437 = scalar_lea.vmem %s9, %s436
      $region60: #{forward.6} parent=19 // pred_fallthru
        _
    $region20: #{forward.6} parent=5 // pred_fallthru
      _
    %p438 = scmp.le.s32.totalorder 1, %s17
    %p439 = scmp.lt.s32.totalorder %s17, 9
    %p440 = pnand %p438, %p439
    %p441 = pneg %p440
    // Predicated region
    $region61: #{forward.6} parent=5 // pred_check
      _
    $region62: #{forward.6} parent=5 // pred_check_branch
      %443 = sbr.rel (%p440) target = $region64
    $region63: #{forward.6} parent=5 // pred_region
      %s444 = ssub.s32 %s17, 1
      %p445 = scmp.lt.s32.totalorder %s27, 1
      %s446 = scalar_select %p445, %s27, 1
      %s447 = smul.addr %s446, 4
      %s448 = scalar_lea.vmem %s0, %s447
      %p449 = pneg %p62
      %p450 = pneg %p59
      %p451 = scmp.lt.s32.totalorder %s29, 3
      %s452 = scalar_select %p451, %s29, 3
      %s453 = smul.addr %s452, 8
      %s454 = smul.addr %s453, 4
      %s455 = scalar_lea.vmem %s1, %s454
      %p456 = pneg %p88
      %p457 = pneg %p85
      %p458 = scmp.lt.s32.totalorder %s29, 3
      %s459 = scalar_select %p458, %s29, 3
      %s460 = scalar_lea.vmem %s2, %s459
      %p461 = pneg %p114
      %p462 = pneg %p111
      %p463 = scmp.lt.s32.totalorder %s29, 3
      %s464 = scalar_select %p463, %s29, 3
      %s465 = smul.addr %s464, 8
      %s466 = smul.addr %s465, 4
      %s467 = scalar_lea.vmem %s3, %s466
      %p468 = pneg %p140
      %p469 = pneg %p137
      %p470 = scmp.lt.s32.totalorder %s29, 3
      %s471 = scalar_select %p470, %s29, 3
      %s472 = scalar_lea.vmem %s4, %s471
      %p473 = pneg %p166
      %p474 = pneg %p163
      %p475 = scmp.lt.s32.totalorder %s29, 3
      %s476 = scalar_select %p475, %s29, 3
      %s477 = smul.addr %s476, 8
      %s478 = smul.addr %s477, 4
      %s479 = scalar_lea.vmem %s5, %s478
      %p480 = pneg %p192
      %p481 = pneg %p189
      %p482 = scmp.lt.s32.totalorder %s29, 3
      %s483 = scalar_select %p482, %s29, 3
      %s484 = scalar_lea.vmem %s6, %s483
      %p485 = pneg %p218
      %p486 = pneg %p215
      %p487 = scmp.lt.s32.totalorder %s29, 3
      %s488 = scalar_select %p487, %s29, 3
      %s489 = smul.addr %s488, 8
      %s490 = scalar_lea.vmem %s7, %s489
      %p491 = pneg %p244
      %p492 = pneg %p241
      %p493 = scmp.lt.s32.totalorder %s29, 3
      %s494 = scalar_select %p493, %s29, 3
      %s495 = smul.addr %s494, 8
      %s496 = scalar_lea.vmem %s8, %s495
      %p497 = pneg %p270
      %p498 = pneg %p267
      %p499 = scmp.lt.s32.totalorder %s29, 3
      %s500 = scalar_select %p499, %s29, 3
      %s501 = smul.addr %s500, 2
      %s502 = smul.addr %s501, 4
      %s503 = scalar_lea.vmem %s9, %s502
      %p504 = pneg %p296
      %p505 = pneg %p293
      %p506 = pneg %p317
      %p507 = pneg %p314
      %p508 = pneg %p345
      %p509 = pneg %p342
      %p510 = scmp.lt.s32.totalorder %s27, 1
      %s511 = scalar_select %p510, %s27, 1
      %p512 = scmp.lt.s32.totalorder %s28, 0
      %s513 = scalar_select %p512, %s28, 0
      %s514 = sadd.s32 %s513, %s511
      %s515 = smul.addr %s514, 4
      %s516 = scalar_lea.vmem %s11, %s515
      %p517 = scmp.lt.s32.totalorder %s27, 1
      %s518 = scalar_select %p517, %s27, 1
      %s519 = smul.addr %s518, 4
      %s520 = scalar_lea.vmem %s0, %s519
      %p521 = scmp.lt.s32.totalorder %s29, 3
      %s522 = scalar_select %p521, %s29, 3
      %s523 = smul.addr %s522, 8
      %s524 = smul.addr %s523, 4
      %s525 = scalar_lea.vmem %s1, %s524
      %p526 = scmp.lt.s32.totalorder %s29, 3
      %s527 = scalar_select %p526, %s29, 3
      %s528 = scalar_lea.vmem %s2, %s527
      %p529 = scmp.lt.s32.totalorder %s29, 3
      %s530 = scalar_select %p529, %s29, 3
      %s531 = smul.addr %s530, 8
      %s532 = smul.addr %s531, 4
      %s533 = scalar_lea.vmem %s3, %s532
      %p534 = scmp.lt.s32.totalorder %s29, 3
      %s535 = scalar_select %p534, %s29, 3
      %s536 = scalar_lea.vmem %s4, %s535
      %p537 = scmp.lt.s32.totalorder %s29, 3
      %s538 = scalar_select %p537, %s29, 3
      %s539 = smul.addr %s538, 8
      %s540 = smul.addr %s539, 4
      %s541 = scalar_lea.vmem %s5, %s540
      %p542 = scmp.lt.s32.totalorder %s29, 3
      %s543 = scalar_select %p542, %s29, 3
      %s544 = scalar_lea.vmem %s6, %s543
      %p545 = scmp.lt.s32.totalorder %s29, 3
      %s546 = scalar_select %p545, %s29, 3
      %s547 = smul.addr %s546, 8
      %s548 = scalar_lea.vmem %s7, %s547
      %p549 = scmp.lt.s32.totalorder %s29, 3
      %s550 = scalar_select %p549, %s29, 3
      %s551 = smul.addr %s550, 8
      %s552 = scalar_lea.vmem %s8, %s551
      %p553 = scmp.lt.s32.totalorder %s29, 3
      %s554 = scalar_select %p553, %s29, 3
      %s555 = smul.addr %s554, 2
      %s556 = smul.addr %s555, 4
      %s557 = scalar_lea.vmem %s9, %s556
      %p558 = scmp.lt.s32.totalorder %s27, 1
      %s559 = scalar_select %p558, %s27, 1
      %p560 = scmp.lt.s32.totalorder %s28, 0
      %s561 = scalar_select %p560, %s28, 0
      %s562 = sadd.s32 %s561, %s559
      %s563 = smul.addr %s562, 4
      %s564 = scalar_lea.vmem %s11, %s563
      %s566 = smul.u32 %s28, 8
      %p567 = scmp.eq.s32.totalorder %s29, 0
      // Predicated region
      $region65: #{forward.6} parent=63 // pred_check
        %p568 = pneg %p567
      $region66: #{forward.6} parent=63 // pred_check_branch
        %570 = sbr.rel (%p568) target = $region68
      $region67: #{forward.6} parent=63 // pred_region
        %vm571 = vcmask 523264
        %572 = vst.msk [vmem:[#allocation2] sm:$0xff] %vm571, 0.0
      $region68: #{forward.6} parent=63 // pred_fallthru
        _
      %v573 = vld [vmem:[%s520] sm:$0xf]
      %s574 = sshra.s32 %s566, 3
      %s575 = sand.u32 %s566, 7
      %s576 = smul.addr %s574, 4
      %s577 = scalar_lea.vmem %s520, %s576
      %v578 = vld [vmem:[%s577] sm:$0xf]
      %v579 = vld [vmem:[%s525] sm:$0xf]
      %v580 = vld [vmem:[%s525 + $0x4] sm:$0xf]
      %v581 = vld [vmem:[%s525 + $0x8] sm:$0xf]
      %v582 = vld [vmem:[%s525 + $0xc] sm:$0xf]
      %v583 = vld [vmem:[%s525 + $0x10] sm:$0xf]
      %v584 = vld [vmem:[%s525 + $0x14] sm:$0xf]
      %v585 = vld [vmem:[%s525 + $0x18] sm:$0xf]
      %v586 = vld [vmem:[%s525 + $0x1c] sm:$0xf]
      %v587 = vld [vmem:[%s528] sm:$0x1]
      %v589 = vlaneseq
      %v590 = vshrl.u32 %v589, 7
      %v591 = vsub.s32 0, %v590
      %v592 = vrot.slane %v587, %v591
      %v602 = vunpack.c.l.b16 %v579
      %v603 = vunpack.c.l.b16 %v580
      %v604 = vunpack.c.l.b16 %v581
      %v605 = vunpack.c.l.b16 %v582
      %v606 = vunpack.c.l.b16 %v583
      %v607 = vunpack.c.l.b16 %v584
      %v608 = vunpack.c.l.b16 %v585
      %v609 = vunpack.c.l.b16 %v586
      %v610 = vpack.c.b16 %v603, %v602
      %v611 = vpack.c.b16 %v605, %v604
      %v612 = vpack.c.b16 %v607, %v606
      %v613 = vpack.c.b16 %v609, %v608
      %vm618 = vcmask 523264
      %v620 = vsel %vm618, %v578, 0
      %622 = vmatprep.subr.bf16.mxu0 0
      %623 = vmatpush1.bf16.msra.mxu0 %v610
      %624 = vmatprep.subr.bf16.mxu0 0
      %625 = vmatpush1.bf16.msra.mxu0 %v611
      %626 = vmatprep.subr.bf16.mxu0 0
      %627 = vmatpush1.bf16.msra.mxu0 %v612
      %628 = vmatprep.subr.bf16.mxu0 0
      %629 = vmatpush1.bf16.msra.mxu0 %v613
      %630 = vmatprep.subr.bf16.mxu0 0
      %631 = vmatpush1.bf16.msra.mxu0 0
      %632 = vmatprep.subr.bf16.mxu0 0
      %633 = vmatpush1.bf16.msra.mxu0 0
      %634 = vmatprep.subr.bf16.mxu0 0
      %635 = vmatpush1.bf16.msra.mxu0 0
      %636 = vmatprep.subr.bf16.mxu0 0
      %637 = vmatpush1.bf16.msra.mxu0 0
      %638 = vmatprep.subr.bf16.mxu0 0
      %639 = vmatpush1.bf16.msra.mxu0 0
      %640 = vmatprep.subr.bf16.mxu0 0
      %641 = vmatpush1.bf16.msra.mxu0 0
      %642 = vmatprep.subr.bf16.mxu0 0
      %643 = vmatpush1.bf16.msra.mxu0 0
      %644 = vmatprep.subr.bf16.mxu0 0
      %645 = vmatpush1.bf16.msra.mxu0 0
      %646 = vmatprep.subr.bf16.mxu0 0
      %647 = vmatpush1.bf16.msra.mxu0 0
      %648 = vmatprep.subr.bf16.mxu0 0
      %649 = vmatpush1.bf16.msra.mxu0 0
      %650 = vmatprep.subr.bf16.mxu0 0
      %651 = vmatpush1.bf16.msra.mxu0 0
      %652 = vmatprep.subr.bf16.mxu0 0
      %653 = vmatpush1.bf16.msra.mxu0 0
      %654 = vmatprep.mubr.bf16.mxu0 0
      %655 = vmatmul.mubr.bf16.gmra.mrb[0].mxu0 %v620
      %v656 = vpop.f32.mrb[0].mxu0
      %v657 = vadd.f32 %v592, %v656
      %v658 = vpop.f32.mrb[0].mxu0
      %v659 = vpop.f32.mrb[0].mxu0
      %v660 = vpop.f32.mrb[0].mxu0
      %661 = vdwg.mxu0
      %v662 = vld [vmem:[%s533] sm:$0xf]
      %v663 = vld [vmem:[%s533 + $0x4] sm:$0xf]
      %v664 = vld [vmem:[%s533 + $0x8] sm:$0xf]
      %v665 = vld [vmem:[%s533 + $0xc] sm:$0xf]
      %v666 = vld [vmem:[%s533 + $0x10] sm:$0xf]
      %v667 = vld [vmem:[%s533 + $0x14] sm:$0xf]
      %v668 = vld [vmem:[%s533 + $0x18] sm:$0xf]
      %v669 = vld [vmem:[%s533 + $0x1c] sm:$0xf]
      %v670 = vld [vmem:[%s536] sm:$0x1]
      %v672 = vlaneseq
      %v673 = vshrl.u32 %v672, 7
      %v674 = vsub.s32 0, %v673
      %v675 = vrot.slane %v670, %v674
      %v685 = vunpack.c.l.b16 %v662
      %v686 = vunpack.c.l.b16 %v663
      %v687 = vunpack.c.l.b16 %v664
      %v688 = vunpack.c.l.b16 %v665
      %v689 = vunpack.c.l.b16 %v666
      %v690 = vunpack.c.l.b16 %v667
      %v691 = vunpack.c.l.b16 %v668
      %v692 = vunpack.c.l.b16 %v669
      %v693 = vpack.c.b16 %v686, %v685
      %v694 = vpack.c.b16 %v688, %v687
      %v695 = vpack.c.b16 %v690, %v689
      %v696 = vpack.c.b16 %v692, %v691
      %v702 = vsel %vm618, %v573, 0
      %704 = vmatprep.subr.bf16.mxu0 0
      %705 = vmatpush1.bf16.msra.mxu0 %v693
      %706 = vmatprep.subr.bf16.mxu0 0
      %707 = vmatpush1.bf16.msra.mxu0 %v694
      %708 = vmatprep.subr.bf16.mxu0 0
      %709 = vmatpush1.bf16.msra.mxu0 %v695
      %710 = vmatprep.subr.bf16.mxu0 0
      %711 = vmatpush1.bf16.msra.mxu0 %v696
      %712 = vmatprep.subr.bf16.mxu0 0
      %713 = vmatpush1.bf16.msra.mxu0 0
      %714 = vmatprep.subr.bf16.mxu0 0
      %715 = vmatpush1.bf16.msra.mxu0 0
      %716 = vmatprep.subr.bf16.mxu0 0
      %717 = vmatpush1.bf16.msra.mxu0 0
      %718 = vmatprep.subr.bf16.mxu0 0
      %719 = vmatpush1.bf16.msra.mxu0 0
      %720 = vmatprep.subr.bf16.mxu0 0
      %721 = vmatpush1.bf16.msra.mxu0 0
      %722 = vmatprep.subr.bf16.mxu0 0
      %723 = vmatpush1.bf16.msra.mxu0 0
      %724 = vmatprep.subr.bf16.mxu0 0
      %725 = vmatpush1.bf16.msra.mxu0 0
      %726 = vmatprep.subr.bf16.mxu0 0
      %727 = vmatpush1.bf16.msra.mxu0 0
      %728 = vmatprep.subr.bf16.mxu0 0
      %729 = vmatpush1.bf16.msra.mxu0 0
      %730 = vmatprep.subr.bf16.mxu0 0
      %731 = vmatpush1.bf16.msra.mxu0 0
      %732 = vmatprep.subr.bf16.mxu0 0
      %733 = vmatpush1.bf16.msra.mxu0 0
      %734 = vmatprep.subr.bf16.mxu0 0
      %735 = vmatpush1.bf16.msra.mxu0 0
      %736 = vmatprep.mubr.bf16.mxu0 0
      %737 = vmatmul.mubr.bf16.gmra.mrb[0].mxu0 %v702
      %v738 = vpop.f32.mrb[0].mxu0
      %v739 = vadd.f32 %v675, %v738
      %v740 = vpop.f32.mrb[0].mxu0
      %v741 = vpop.f32.mrb[0].mxu0
      %v742 = vpop.f32.mrb[0].mxu0
      %743 = vdwg.mxu0
      %v744 = vld [vmem:[%s541] sm:$0xf]
      %v745 = vld [vmem:[%s541 + $0x4] sm:$0xf]
      %v746 = vld [vmem:[%s541 + $0x8] sm:$0xf]
      %v747 = vld [vmem:[%s541 + $0xc] sm:$0xf]
      %v748 = vld [vmem:[%s541 + $0x10] sm:$0xf]
      %v749 = vld [vmem:[%s541 + $0x14] sm:$0xf]
      %v750 = vld [vmem:[%s541 + $0x18] sm:$0xf]
      %v751 = vld [vmem:[%s541 + $0x1c] sm:$0xf]
      %v752 = vld [vmem:[%s544] sm:$0x1]
      %v754 = vlaneseq
      %v755 = vshrl.u32 %v754, 7
      %v756 = vsub.s32 0, %v755
      %v757 = vrot.slane %v752, %v756
      %v767 = vunpack.c.l.b16 %v744
      %v768 = vunpack.c.l.b16 %v745
      %v769 = vunpack.c.l.b16 %v746
      %v770 = vunpack.c.l.b16 %v747
      %v771 = vunpack.c.l.b16 %v748
      %v772 = vunpack.c.l.b16 %v749
      %v773 = vunpack.c.l.b16 %v750
      %v774 = vunpack.c.l.b16 %v751
      %v775 = vpack.c.b16 %v768, %v767
      %v776 = vpack.c.b16 %v770, %v769
      %v777 = vpack.c.b16 %v772, %v771
      %v778 = vpack.c.b16 %v774, %v773
      %783 = vmatprep.subr.bf16.mxu0 0
      %784 = vmatpush1.bf16.msra.mxu0 %v775
      %785 = vmatprep.subr.bf16.mxu0 0
      %786 = vmatpush1.bf16.msra.mxu0 %v776
      %787 = vmatprep.subr.bf16.mxu0 0
      %788 = vmatpush1.bf16.msra.mxu0 %v777
      %789 = vmatprep.subr.bf16.mxu0 0
      %790 = vmatpush1.bf16.msra.mxu0 %v778
      %791 = vmatprep.subr.bf16.mxu0 0
      %792 = vmatpush1.bf16.msra.mxu0 0
      %793 = vmatprep.subr.bf16.mxu0 0
      %794 = vmatpush1.bf16.msra.mxu0 0
      %795 = vmatprep.subr.bf16.mxu0 0
      %796 = vmatpush1.bf16.msra.mxu0 0
      %797 = vmatprep.subr.bf16.mxu0 0
      %798 = vmatpush1.bf16.msra.mxu0 0
      %799 = vmatprep.subr.bf16.mxu0 0
      %800 = vmatpush1.bf16.msra.mxu0 0
      %801 = vmatprep.subr.bf16.mxu0 0
      %802 = vmatpush1.bf16.msra.mxu0 0
      %803 = vmatprep.subr.bf16.mxu0 0
      %804 = vmatpush1.bf16.msra.mxu0 0
      %805 = vmatprep.subr.bf16.mxu0 0
      %806 = vmatpush1.bf16.msra.mxu0 0
      %807 = vmatprep.subr.bf16.mxu0 0
      %808 = vmatpush1.bf16.msra.mxu0 0
      %809 = vmatprep.subr.bf16.mxu0 0
      %810 = vmatpush1.bf16.msra.mxu0 0
      %811 = vmatprep.subr.bf16.mxu0 0
      %812 = vmatpush1.bf16.msra.mxu0 0
      %813 = vmatprep.subr.bf16.mxu0 0
      %814 = vmatpush1.bf16.msra.mxu0 0
      %815 = vmatprep.mubr.bf16.mxu0 0
      %816 = vmatmul.mubr.bf16.gmra.mrb[0].mxu0 %v702
      %v817 = vpop.f32.mrb[0].mxu0
      %v818 = vadd.f32 %v757, %v817
      %v819 = vpop.f32.mrb[0].mxu0
      %v820 = vpop.f32.mrb[0].mxu0
      %v821 = vpop.f32.mrb[0].mxu0
      %822 = vdwg.mxu0
      %v823 = vld [vmem:[%s548] sm:$0xff]
      %v824 = vld [vmem:[%s552] sm:$0xff]
      %s825 = scalar_lea.vmem %s548, %s566
      %v826 = vld [vmem:[%s825] sm:$0xff]
      %s827 = scalar_lea.vmem %s552, %s566
      %v828 = vld [vmem:[%s827] sm:$0xff]
      %v829 = vmul.f32 %v657, %v826
      %831 = vrot.lane.b32.xlu0 %v828, 8
      %v832 = vpop.permute.xlu0 %831
      %v834 = vmul.f32 %v657, %v832
      %836 = vrot.lane.b32.xlu0 %v834, 120
      %v837 = vpop.permute.xlu0 %836
      %v839 = vsub.f32 %v829, %v837
      %vm840 = vcmask 64512
      %841 = vst.msk [vmem:[#allocation3] sm:$0xff] %vm840, %v839
      %843 = vrot.lane.b32.xlu0 %v826, 8
      %v844 = vpop.permute.xlu0 %843
      %v846 = vmul.f32 %v657, %v844
      %v847 = vmul.f32 %v657, %v828
      %849 = vrot.lane.b32.xlu0 %v847, 8
      %v850 = vpop.permute.xlu0 %849
      %v852 = vadd.f32 %v846, %v850
      %vm853 = vcmask 130112
      %854 = vst.msk [vmem:[#allocation3] sm:$0xff] %vm853, %v852
      %v855 = vmul.f32 %v739, %v823
      %857 = vrot.lane.b32.xlu0 %v824, 8
      %v858 = vpop.permute.xlu0 %857
      %v860 = vmul.f32 %v739, %v858
      %862 = vrot.lane.b32.xlu0 %v860, 120
      %v863 = vpop.permute.xlu0 %862
      %v865 = vsub.f32 %v855, %v863
      %866 = vst.msk [vmem:[#allocation4] sm:$0xff] %vm840, %v865
      %868 = vrot.lane.b32.xlu0 %v823, 8
      %v869 = vpop.permute.xlu0 %868
      %v871 = vmul.f32 %v739, %v869
      %v872 = vmul.f32 %v739, %v824
      %874 = vrot.lane.b32.xlu0 %v872, 8
      %v875 = vpop.permute.xlu0 %874
      %v877 = vadd.f32 %v871, %v875
      %878 = vst.msk [vmem:[#allocation4] sm:$0xff] %vm853, %v877
      %v879 = vld [vmem:[#allocation3] sm:$0xff]
      %v880 = vpack.c.bf16 %v879, %v879
      %v881 = vld [vmem:[#allocation4] sm:$0xff]
      %v882 = vpack.c.bf16 %v881, %v881
      %vm883 = vcmask 130048
      %v885 = vsel %vm883, %v880, 0
      %v888 = vsel %vm883, %v882, 0
      %890 = vmatprep.subr.bf16.mxu0 0
      %891 = vmatpush1.bf16.xpose.msra.mxu0 %v888
      %892 = vmatprep.subr.bf16.mxu0 0
      %893 = vmatpush1.bf16.xpose.msra.mxu0 0
      %894 = vmatprep.subr.bf16.mxu0 0
      %895 = vmatpush1.bf16.xpose.msra.mxu0 0
      %896 = vmatprep.subr.bf16.mxu0 0
      %897 = vmatpush1.bf16.xpose.msra.mxu0 0
      %898 = vmatprep.subr.bf16.mxu0 0
      %899 = vmatpush1.bf16.xpose.msra.mxu0 0
      %900 = vmatprep.subr.bf16.mxu0 0
      %901 = vmatpush1.bf16.xpose.msra.mxu0 0
      %902 = vmatprep.subr.bf16.mxu0 0
      %903 = vmatpush1.bf16.xpose.msra.mxu0 0
      %904 = vmatprep.subr.bf16.mxu0 0
      %905 = vmatpush1.bf16.xpose.msra.mxu0 0
      %906 = vmatprep.subr.bf16.mxu0 0
      %907 = vmatpush1.bf16.xpose.msra.mxu0 0
      %908 = vmatprep.subr.bf16.mxu0 0
      %909 = vmatpush1.bf16.xpose.msra.mxu0 0
      %910 = vmatprep.subr.bf16.mxu0 0
      %911 = vmatpush1.bf16.xpose.msra.mxu0 0
      %912 = vmatprep.subr.bf16.mxu0 0
      %913 = vmatpush1.bf16.xpose.msra.mxu0 0
      %914 = vmatprep.subr.bf16.mxu0 0
      %915 = vmatpush1.bf16.xpose.msra.mxu0 0
      %916 = vmatprep.subr.bf16.mxu0 0
      %917 = vmatpush1.bf16.xpose.msra.mxu0 0
      %918 = vmatprep.subr.bf16.mxu0 0
      %919 = vmatpush1.bf16.xpose.msra.mxu0 0
      %920 = vmatprep.subr.bf16.mxu0 0
      %921 = vmatpush1.bf16.xpose.msra.mxu0 0
      %922 = vmatprep.mubr.bf16.mxu0 0
      %923 = vmatmul.mubr.bf16.gmra.mrb[0].mxu0 %v885
      %v924 = vpop.f32.mrb[0].mxu0
      %v925 = vadd.f32 0.0, %v924
      %v926 = vpop.f32.mrb[0].mxu0
      %v927 = vpop.f32.mrb[0].mxu0
      %v928 = vpop.f32.mrb[0].mxu0
      %929 = vdwg.mxu0
      %v930 = vsel %vm840, %v925, -inf
      %931 = vmax.xlane.f32.xlu0 %v930
      %v932 = vpop.xlane.xlu0 %931
      %v933 = vsub.f32 %v925, %v932
      %v934 = vmul.f32 %v933, 1.442695
      %v935 = vpow.pop %v934
      %v936 = vsel %vm840, %v935, 0.0
      %937 = vadd.xlane.f32.xlu0 %v936
      %v938 = vpop.xlane.xlu0 %937
      %v939 = vrcp.pop %v938
      %v940 = vmul.f32 %v935, %v939
      %v941 = vpack.c.bf16 %v940, %v940
      %v942 = vpack.c.bf16 %v818, %v818
      %v944 = vsel %vm840, %v941, 0
      %vm946 = vcmask 1043456
      %v948 = vsel %vm946, %v942, 0
      %950 = vmatprep.subr.bf16.mxu0 0
      %951 = vmatpush1.bf16.msra.mxu0 %v948
      %952 = vmatprep.subr.bf16.mxu0 0
      %953 = vmatpush1.bf16.msra.mxu0 0
      %954 = vmatprep.subr.bf16.mxu0 0
      %955 = vmatpush1.bf16.msra.mxu0 0
      %956 = vmatprep.subr.bf16.mxu0 0
      %957 = vmatpush1.bf16.msra.mxu0 0
      %958 = vmatprep.subr.bf16.mxu0 0
      %959 = vmatpush1.bf16.msra.mxu0 0
      %960 = vmatprep.subr.bf16.mxu0 0
      %961 = vmatpush1.bf16.msra.mxu0 0
      %962 = vmatprep.subr.bf16.mxu0 0
      %963 = vmatpush1.bf16.msra.mxu0 0
      %964 = vmatprep.subr.bf16.mxu0 0
      %965 = vmatpush1.bf16.msra.mxu0 0
      %966 = vmatprep.subr.bf16.mxu0 0
      %967 = vmatpush1.bf16.msra.mxu0 0
      %968 = vmatprep.subr.bf16.mxu0 0
      %969 = vmatpush1.bf16.msra.mxu0 0
      %970 = vmatprep.subr.bf16.mxu0 0
      %971 = vmatpush1.bf16.msra.mxu0 0
      %972 = vmatprep.subr.bf16.mxu0 0
      %973 = vmatpush1.bf16.msra.mxu0 0
      %974 = vmatprep.subr.bf16.mxu0 0
      %975 = vmatpush1.bf16.msra.mxu0 0
      %976 = vmatprep.subr.bf16.mxu0 0
      %977 = vmatpush1.bf16.msra.mxu0 0
      %978 = vmatprep.subr.bf16.mxu0 0
      %979 = vmatpush1.bf16.msra.mxu0 0
      %980 = vmatprep.subr.bf16.mxu0 0
      %981 = vmatpush1.bf16.msra.mxu0 0
      %982 = vmatprep.mubr.bf16.mxu0 0
      %983 = vmatmul.mubr.bf16.gmra.mrb[0].mxu0 %v944
      %v984 = vpop.f32.mrb[0].mxu0
      %v985 = vadd.f32 0.0, %v984
      %v986 = vpop.f32.mrb[0].mxu0
      %v987 = vpop.f32.mrb[0].mxu0
      %v988 = vpop.f32.mrb[0].mxu0
      %989 = vdwg.mxu0
      %v990 = vld [vmem:[#allocation2] sm:$0xff]
      %v991 = vpack.c.bf16 %v985, %v985
      %v992 = vld [vmem:[%s557] sm:$0xf]
      %v993 = vld [vmem:[%s557 + $0x4] sm:$0xf]
      %v996 = vunpack.c.l.b16 %v992
      %v997 = vunpack.c.l.b16 %v993
      %v998 = vpack.c.b16 %v997, %v996
      %v1001 = vsel %vm883, %v991, 0
      %1003 = vmatprep.subr.bf16.mxu0 0
      %1004 = vmatpush1.bf16.msra.mxu0 %v998
      %1005 = vmatprep.subr.bf16.mxu0 0
      %1006 = vmatpush1.bf16.msra.mxu0 0
      %1007 = vmatprep.subr.bf16.mxu0 0
      %1008 = vmatpush1.bf16.msra.mxu0 0
      %1009 = vmatprep.subr.bf16.mxu0 0
      %1010 = vmatpush1.bf16.msra.mxu0 0
      %1011 = vmatprep.subr.bf16.mxu0 0
      %1012 = vmatpush1.bf16.msra.mxu0 0
      %1013 = vmatprep.subr.bf16.mxu0 0
      %1014 = vmatpush1.bf16.msra.mxu0 0
      %1015 = vmatprep.subr.bf16.mxu0 0
      %1016 = vmatpush1.bf16.msra.mxu0 0
      %1017 = vmatprep.subr.bf16.mxu0 0
      %1018 = vmatpush1.bf16.msra.mxu0 0
      %1019 = vmatprep.subr.bf16.mxu0 0
      %1020 = vmatpush1.bf16.msra.mxu0 0
      %1021 = vmatprep.subr.bf16.mxu0 0
      %1022 = vmatpush1.bf16.msra.mxu0 0
      %1023 = vmatprep.subr.bf16.mxu0 0
      %1024 = vmatpush1.bf16.msra.mxu0 0
      %1025 = vmatprep.subr.bf16.mxu0 0
      %1026 = vmatpush1.bf16.msra.mxu0 0
      %1027 = vmatprep.subr.bf16.mxu0 0
      %1028 = vmatpush1.bf16.msra.mxu0 0
      %1029 = vmatprep.subr.bf16.mxu0 0
      %1030 = vmatpush1.bf16.msra.mxu0 0
      %1031 = vmatprep.subr.bf16.mxu0 0
      %1032 = vmatpush1.bf16.msra.mxu0 0
      %1033 = vmatprep.subr.bf16.mxu0 0
      %1034 = vmatpush1.bf16.msra.mxu0 0
      %1035 = vmatprep.mubr.bf16.mxu0 0
      %1036 = vmatmul.mubr.bf16.gmra.mrb[0].mxu0 %v1001
      %v1037 = vpop.f32.mrb[0].mxu0
      %v1038 = vadd.f32 0.0, %v1037
      %v1039 = vpop.f32.mrb[0].mxu0
      %v1040 = vpop.f32.mrb[0].mxu0
      %v1041 = vpop.f32.mrb[0].mxu0
      %1042 = vdwg.mxu0
      %v1043 = vadd.f32 %v990, %v1038
      %1044 = vst.msk [vmem:[#allocation2] sm:$0xff] %vm618, %v1043
      %p1045 = scmp.eq.s32.totalorder %s29, 3
      // Predicated region
      $region69: #{forward.6} parent=63 // pred_check
        %p1046 = pneg %p1045
      $region70: #{forward.6} parent=63 // pred_check_branch
        %1048 = sbr.rel (%p1046) target = $region72
      $region71: #{forward.6} parent=63 // pred_region
        %v1049 = vld [vmem:[#allocation2] sm:$0xff]
        %v1050 = vld [vmem:[%s10] sm:$0x1]
        %v1052 = vlaneseq
        %v1053 = vshrl.u32 %v1052, 7
        %v1054 = vsub.s32 0, %v1053
        %v1055 = vrot.slane %v1050, %v1054
        %v1057 = vadd.f32 %v1049, %v1055
        %v1058 = vpack.c.bf16 %v1057, %v1057
        %vm1059 = vcmask 519168
        %1060 = vst.msk [vmem:[%s564] sm:$0xf] %vm1059, %v1058
      $region72: #{forward.6} parent=63 // pred_fallthru
        _
      %p1061 = scmp.lt.s32.totalorder %s27, 1
      %s1062 = scalar_select %p1061, %s27, 1
      %p1063 = scmp.lt.s32.totalorder %s28, 0
      %s1064 = scalar_select %p1063, %s28, 0
      %s1065 = sadd.s32 %s1064, %s1062
      %s1066 = smul.addr %s1065, 4
      %s1067 = scalar_lea.vmem %s11, %s1066
      // Predicated region
      $region73: #{forward.6} parent=63 // pred_check
        %p1068 = pneg %p342
      $region74: #{forward.6} parent=63 // pred_check_branch
        %1070 = sbr.rel (%p1068) target = $region76
      $region75: #{forward.6} parent=63 // pred_region
        _
      $region76: #{forward.6} parent=63 // pred_fallthru
        _
    $region64: #{forward.6} parent=5 // pred_fallthru
      _
    %p1071 = scmp.le.s32.totalorder 2, %s17
    // Predicated region
    $region77: #{forward.6} parent=5 // pred_check
      %p1072 = pneg %p1071
    $region78: #{forward.6} parent=5 // pred_check_branch
      %1074 = sbr.rel (%p1072) target = $region80
    $region79: #{forward.6} parent=5 // pred_region
      %s1075 = ssub.s32 %s17, 2
      // Predicated region
      $region81: #{forward.6} parent=79 // pred_check
        %p1076 = pneg %p348
      $region82: #{forward.6} parent=79 // pred_check_branch
        %1078 = sbr.rel (%p1076) target = $region84
      $region83: #{forward.6} parent=79 // pred_region
        %p1079 = scmp.lt.s32.totalorder %s30, 1
        %s1080 = scalar_select %p1079, %s30, 1
        %p1081 = scmp.lt.s32.totalorder %s31, 0
        %s1082 = scalar_select %p1081, %s31, 0
        %s1083 = sadd.s32 %s1082, %s1080
        %s1084 = smul.addr %s1083, 4
        %s1085 = scalar_lea.vmem %s11, %s1084
      $region84: #{forward.6} parent=79 // pred_fallthru
        _
    $region80: #{forward.6} parent=5 // pred_fallthru
      _
  $region6: #{forward.6} parent=0 // loop_footer
    %s21 = sadd.s32 1, %s17
  $region7: #{forward.6} parent=0 // loop_footer_branch
    %16 = sbr.rel target = $region3
  $region8: #{forward.6} parent=0 // loop_exit
    _

// kernel: forward.9
$region0: #{forward.9}
  #allocation0 [shape = 'u32[]', space=smem, size = 0x4, offset = 0x4, fixed_abs, tag = 'smem constant byte address 0x4 - core index']
  #allocation1 [shape = 'u32[144,128]{1,0:T(1,128)}', space=vmem, size = 0x12000, scoped, tag = 'internal scratch']
  %s0 = inlined_call_operand.vmem [shape: bf16[16,64], index: 0, kind: input, shape index: {}]
  %s1 = inlined_call_operand.vmem [shape: f32[1,64], index: 1, kind: input, shape index: {}]
  %s2 = inlined_call_operand.vmem [shape: f32[1,64], index: 2, kind: input, shape index: {}]
  %s3 = inlined_call_operand.vmem [shape: bf16[64,64], index: 3, kind: input, shape index: {}]
  %s4 = inlined_call_operand.vmem [shape: f32[1,64], index: 4, kind: input, shape index: {}]
  %s5 = inlined_call_operand.vmem [shape: f32[1,64], index: 5, kind: input, shape index: {}]
  %s6 = inlined_call_operand.vmem [shape: f32[1,64], index: 6, kind: input, shape index: {}]
  %s7 = inlined_call_operand.vmem [shape: f32[16,64], index: 7, kind: output, shape index: {}]
  %s8 = sld [smem:[#allocation0]]
  $region38: #{forward.9} parent=0
    _
  %s10 = ssub.s32 1, %s8
  %s11 = scalar_select 0, %s10, %s8
  // Predicated region
  $region2: #{forward.9} parent=0 // pred_check
    _
  $region3: #{forward.9} parent=0 // pred_check_branch
    %13 = sbr.rel (0) target = $region5
  $region4: #{forward.9} parent=0 // pred_region
    _
  $region5: #{forward.9} parent=0 // pred_fallthru
    _
  // Predicated region
  $region6: #{forward.9} parent=0 // pred_check
    _
  $region7: #{forward.9} parent=0 // pred_check_branch
    %15 = sbr.rel (0) target = $region9
  $region8: #{forward.9} parent=0 // pred_region
    _
  $region9: #{forward.9} parent=0 // pred_fallthru
    _
  // Predicated region
  $region10: #{forward.9} parent=0 // pred_check
    _
  $region11: #{forward.9} parent=0 // pred_check_branch
    %17 = sbr.rel (0) target = $region13
  $region12: #{forward.9} parent=0 // pred_region
    _
  $region13: #{forward.9} parent=0 // pred_fallthru
    _
  // Predicated region
  $region14: #{forward.9} parent=0 // pred_check
    _
  $region15: #{forward.9} parent=0 // pred_check_branch
    %19 = sbr.rel (0) target = $region17
  $region16: #{forward.9} parent=0 // pred_region
    _
  $region17: #{forward.9} parent=0 // pred_fallthru
    _
  // Predicated region
  $region18: #{forward.9} parent=0 // pred_check
    _
  $region19: #{forward.9} parent=0 // pred_check_branch
    %21 = sbr.rel (0) target = $region21
  $region20: #{forward.9} parent=0 // pred_region
    _
  $region21: #{forward.9} parent=0 // pred_fallthru
    _
  // Predicated region
  $region22: #{forward.9} parent=0 // pred_check
    _
  $region23: #{forward.9} parent=0 // pred_check_branch
    %23 = sbr.rel (0) target = $region25
  $region24: #{forward.9} parent=0 // pred_region
    _
  $region25: #{forward.9} parent=0 // pred_fallthru
    _
  // Predicated region
  $region26: #{forward.9} parent=0 // pred_check
    _
  $region27: #{forward.9} parent=0 // pred_check_branch
    %25 = sbr.rel (0) target = $region29
  $region28: #{forward.9} parent=0 // pred_region
    _
  $region29: #{forward.9} parent=0 // pred_fallthru
    _
  %v27 = vld [vmem:[%s0] sm:$0xf]
  %v28 = vld [vmem:[%s0 + $0x4] sm:$0xf]
  %v29 = vunpack.c.l.bf16 %v27
  %v30 = vunpack.c.l.bf16 %v28
  %vm31 = vcmask 523264
  %v32 = vsel %vm31, %v29, 0.0
  %33 = vadd.xlane.f32.xlu0 %v32
  %v34 = vpop.xlane.xlu0 %33
  %v35 = vsel %vm31, %v30, 0.0
  %36 = vadd.xlane.f32.xlu0 %v35
  %v37 = vpop.xlane.xlu0 %36
  %v38 = vrcp.pop 64.0
  %v39 = vmul.f32 %v34, %v38
  %v40 = vmul.f32 %v37, %v38
  %v41 = vsub.f32 %v29, %v39
  %v42 = vsub.f32 %v30, %v40
  %v43 = vmul.f32 %v41, %v41
  %v44 = vmul.f32 %v42, %v42
  %v45 = vsel %vm31, %v43, 0.0
  %46 = vadd.xlane.f32.xlu0 %v45
  %v47 = vpop.xlane.xlu0 %46
  %v48 = vsel %vm31, %v44, 0.0
  %49 = vadd.xlane.f32.xlu0 %v48
  %v50 = vpop.xlane.xlu0 %49
  %v51 = vmul.f32 %v47, %v38
  %v52 = vmul.f32 %v50, %v38
  %v53 = vadd.f32 %v51, 1e-05
  %v54 = vadd.f32 %v52, 1e-05
  %v55 = vrsqrt.pop %v53
  %v56 = vrsqrt.pop %v54
  %v57 = vmul.f32 %v41, %v55
  %v58 = vmul.f32 %v42, %v56
  %v59 = vld [vmem:[%s1] sm:$0x1]
  %v61 = vlaneseq
  %v62 = vshrl.u32 %v61, 7
  %v63 = vsub.s32 0, %v62
  %v64 = vrot.slane %v59, %v63
  %v66 = vmul.f32 %v57, %v64
  %v67 = vmul.f32 %v58, %v64
  %v68 = vld [vmem:[%s2] sm:$0x1]
  %v70 = vlaneseq
  %v71 = vshrl.u32 %v70, 7
  %v72 = vsub.s32 0, %v71
  %v73 = vrot.slane %v68, %v72
  %v75 = vadd.f32 %v66, %v73
  %v76 = vadd.f32 %v67, %v73
  %v77 = vpack.c.bf16 %v76, %v75
  %v78 = vld [vmem:[%s3] sm:$0xf]
  %v79 = vld [vmem:[%s3 + $0x4] sm:$0xf]
  %v80 = vld [vmem:[%s3 + $0x8] sm:$0xf]
  %v81 = vld [vmem:[%s3 + $0xc] sm:$0xf]
  %v82 = vld [vmem:[%s3 + $0x10] sm:$0xf]
  %v83 = vld [vmem:[%s3 + $0x14] sm:$0xf]
  %v84 = vld [vmem:[%s3 + $0x18] sm:$0xf]
  %v85 = vld [vmem:[%s3 + $0x1c] sm:$0xf]
  %v86 = vld [vmem:[%s4] sm:$0x1]
  %v88 = vlaneseq
  %v89 = vshrl.u32 %v88, 7
  %v90 = vsub.s32 0, %v89
  %v91 = vrot.slane %v86, %v90
  %v101 = vunpack.c.l.b16 %v78
  %v102 = vunpack.c.l.b16 %v79
  %v103 = vunpack.c.l.b16 %v80
  %v104 = vunpack.c.l.b16 %v81
  %v105 = vunpack.c.l.b16 %v82
  %v106 = vunpack.c.l.b16 %v83
  %v107 = vunpack.c.l.b16 %v84
  %v108 = vunpack.c.l.b16 %v85
  %v109 = vpack.c.b16 %v102, %v101
  %v110 = vpack.c.b16 %v104, %v103
  %v111 = vpack.c.b16 %v106, %v105
  %v112 = vpack.c.b16 %v108, %v107
  %v118 = vsel %vm31, %v77, 0
  %120 = vmatprep.subr.bf16.mxu0 0
  %121 = vmatpush1.bf16.msra.mxu0 %v109
  %122 = vmatprep.subr.bf16.mxu0 0
  %123 = vmatpush1.bf16.msra.mxu0 %v110
  %124 = vmatprep.subr.bf16.mxu0 0
  %125 = vmatpush1.bf16.msra.mxu0 %v111
  %126 = vmatprep.subr.bf16.mxu0 0
  %127 = vmatpush1.bf16.msra.mxu0 %v112
  %128 = vmatprep.subr.bf16.mxu0 0
  %129 = vmatpush1.bf16.msra.mxu0 0
  %130 = vmatprep.subr.bf16.mxu0 0
  %131 = vmatpush1.bf16.msra.mxu0 0
  %132 = vmatprep.subr.bf16.mxu0 0
  %133 = vmatpush1.bf16.msra.mxu0 0
  %134 = vmatprep.subr.bf16.mxu0 0
  %135 = vmatpush1.bf16.msra.mxu0 0
  %136 = vmatprep.subr.bf16.mxu0 0
  %137 = vmatpush1.bf16.msra.mxu0 0
  %138 = vmatprep.subr.bf16.mxu0 0
  %139 = vmatpush1.bf16.msra.mxu0 0
  %140 = vmatprep.subr.bf16.mxu0 0
  %141 = vmatpush1.bf16.msra.mxu0 0
  %142 = vmatprep.subr.bf16.mxu0 0
  %143 = vmatpush1.bf16.msra.mxu0 0
  %144 = vmatprep.subr.bf16.mxu0 0
  %145 = vmatpush1.bf16.msra.mxu0 0
  %146 = vmatprep.subr.bf16.mxu0 0
  %147 = vmatpush1.bf16.msra.mxu0 0
  %148 = vmatprep.subr.bf16.mxu0 0
  %149 = vmatpush1.bf16.msra.mxu0 0
  %150 = vmatprep.subr.bf16.mxu0 0
  %151 = vmatpush1.bf16.msra.mxu0 0
  %152 = vmatprep.mubr.bf16.mxu0 0
  %153 = vmatmul.mubr.bf16.gmra.mrb[0].mxu0 %v118
  %v154 = vpop.f32.mrb[0].mxu0
  %v155 = vadd.f32 %v91, %v154
  %v156 = vpop.f32.mrb[0].mxu0
  %v157 = vpop.f32.mrb[0].mxu0
  %v158 = vadd.f32 %v91, %v157
  %v159 = vpop.f32.mrb[0].mxu0
  %160 = vdwg.mxu0
  %v161 = vmax.f32 %v155, 0.0
  %v162 = vmax.f32 %v158, 0.0
  %v163 = vsel %vm31, %v161, 0.0
  %164 = vadd.xlane.f32.xlu0 %v163
  %v165 = vpop.xlane.xlu0 %164
  %v166 = vsel %vm31, %v162, 0.0
  %167 = vadd.xlane.f32.xlu0 %v166
  %v168 = vpop.xlane.xlu0 %167
  %v169 = vmul.f32 %v165, %v38
  %v170 = vmul.f32 %v168, %v38
  %v171 = vsub.f32 %v161, %v169
  %v172 = vsub.f32 %v162, %v170
  %v173 = vmul.f32 %v171, %v171
  %v174 = vmul.f32 %v172, %v172
  %v175 = vsel %vm31, %v173, 0.0
  %176 = vadd.xlane.f32.xlu0 %v175
  %v177 = vpop.xlane.xlu0 %176
  %v178 = vsel %vm31, %v174, 0.0
  %179 = vadd.xlane.f32.xlu0 %v178
  %v180 = vpop.xlane.xlu0 %179
  %v181 = vmul.f32 %v177, %v38
  %v182 = vmul.f32 %v180, %v38
  %v183 = vadd.f32 %v181, 1e-05
  %v184 = vadd.f32 %v182, 1e-05
  %v185 = vrsqrt.pop %v183
  %v186 = vrsqrt.pop %v184
  %v187 = vmul.f32 %v171, %v185
  %v188 = vmul.f32 %v172, %v186
  %v189 = vld [vmem:[%s5] sm:$0x1]
  %v191 = vlaneseq
  %v192 = vshrl.u32 %v191, 7
  %v193 = vsub.s32 0, %v192
  %v194 = vrot.slane %v189, %v193
  %v196 = vmul.f32 %v187, %v194
  %v197 = vmul.f32 %v188, %v194
  %v198 = vld [vmem:[%s6] sm:$0x1]
  %v200 = vlaneseq
  %v201 = vshrl.u32 %v200, 7
  %v202 = vsub.s32 0, %v201
  %v203 = vrot.slane %v198, %v202
  %v205 = vadd.f32 %v196, %v203
  %v206 = vadd.f32 %v197, %v203
  %207 = vst.msk [vmem:[%s7] sm:$0xff] %vm31, %v205
  %208 = vst.msk [vmem:[%s7 + $0x8] sm:$0xff] %vm31, %v206
  // Predicated region
  $region30: #{forward.9} parent=0 // pred_check
    _
  $region31: #{forward.9} parent=0 // pred_check_branch
    %210 = sbr.rel (0) target = $region33
  $region32: #{forward.9} parent=0 // pred_region
    _
  $region33: #{forward.9} parent=0 // pred_fallthru
    _
  // Predicated region
  $region34: #{forward.9} parent=0 // pred_check
    _
  $region35: #{forward.9} parent=0 // pred_check_branch
    %212 = sbr.rel (0) target = $region37
  $region36: #{forward.9} parent=0 // pred_region
    _
  $region37: #{forward.9} parent=0 // pred_fallthru
    _

// kernel: forward.7
$region0: #{forward.7}
  #allocation0 [shape = 'u32[]', space=smem, size = 0x4, offset = 0x4, fixed_abs, tag = 'smem constant byte address 0x4 - core index']
  #allocation1 [shape = 'u32[144,128]{1,0:T(1,128)}', space=vmem, size = 0x12000, scoped, tag = 'internal scratch']
  %s0 = inlined_call_operand.vmem [shape: bf16[16,64], index: 0, kind: input, shape index: {}]
  %s1 = inlined_call_operand.vmem [shape: f32[1,64], index: 1, kind: input, shape index: {}]
  %s2 = inlined_call_operand.vmem [shape: f32[1,64], index: 2, kind: input, shape index: {}]
  %s3 = inlined_call_operand.vmem [shape: bf16[64,64], index: 3, kind: input, shape index: {}]
  %s4 = inlined_call_operand.vmem [shape: f32[1,64], index: 4, kind: input, shape index: {}]
  %s5 = inlined_call_operand.vmem [shape: f32[1,64], index: 5, kind: input, shape index: {}]
  %s6 = inlined_call_operand.vmem [shape: f32[1,64], index: 6, kind: input, shape index: {}]
  %s7 = inlined_call_operand.vmem [shape: bf16[16,64], index: 7, kind: output, shape index: {}]
  %s8 = sld [smem:[#allocation0]]
  $region38: #{forward.7} parent=0
    _
  %s10 = ssub.s32 1, %s8
  %s11 = scalar_select 0, %s10, %s8
  // Predicated region
  $region2: #{forward.7} parent=0 // pred_check
    _
  $region3: #{forward.7} parent=0 // pred_check_branch
    %13 = sbr.rel (0) target = $region5
  $region4: #{forward.7} parent=0 // pred_region
    _
  $region5: #{forward.7} parent=0 // pred_fallthru
    _
  // Predicated region
  $region6: #{forward.7} parent=0 // pred_check
    _
  $region7: #{forward.7} parent=0 // pred_check_branch
    %15 = sbr.rel (0) target = $region9
  $region8: #{forward.7} parent=0 // pred_region
    _
  $region9: #{forward.7} parent=0 // pred_fallthru
    _
  // Predicated region
  $region10: #{forward.7} parent=0 // pred_check
    _
  $region11: #{forward.7} parent=0 // pred_check_branch
    %17 = sbr.rel (0) target = $region13
  $region12: #{forward.7} parent=0 // pred_region
    _
  $region13: #{forward.7} parent=0 // pred_fallthru
    _
  // Predicated region
  $region14: #{forward.7} parent=0 // pred_check
    _
  $region15: #{forward.7} parent=0 // pred_check_branch
    %19 = sbr.rel (0) target = $region17
  $region16: #{forward.7} parent=0 // pred_region
    _
  $region17: #{forward.7} parent=0 // pred_fallthru
    _
  // Predicated region
  $region18: #{forward.7} parent=0 // pred_check
    _
  $region19: #{forward.7} parent=0 // pred_check_branch
    %21 = sbr.rel (0) target = $region21
  $region20: #{forward.7} parent=0 // pred_region
    _
  $region21: #{forward.7} parent=0 // pred_fallthru
    _
  // Predicated region
  $region22: #{forward.7} parent=0 // pred_check
    _
  $region23: #{forward.7} parent=0 // pred_check_branch
    %23 = sbr.rel (0) target = $region25
  $region24: #{forward.7} parent=0 // pred_region
    _
  $region25: #{forward.7} parent=0 // pred_fallthru
    _
  // Predicated region
  $region26: #{forward.7} parent=0 // pred_check
    _
  $region27: #{forward.7} parent=0 // pred_check_branch
    %25 = sbr.rel (0) target = $region29
  $region28: #{forward.7} parent=0 // pred_region
    _
  $region29: #{forward.7} parent=0 // pred_fallthru
    _
  %v27 = vld [vmem:[%s0] sm:$0xf]
  %v28 = vld [vmem:[%s0 + $0x4] sm:$0xf]
  %v29 = vunpack.c.l.bf16 %v27
  %v30 = vunpack.c.l.bf16 %v28
  %vm31 = vcmask 523264
  %v32 = vsel %vm31, %v29, 0.0
  %33 = vadd.xlane.f32.xlu0 %v32
  %v34 = vpop.xlane.xlu0 %33
  %v35 = vsel %vm31, %v30, 0.0
  %36 = vadd.xlane.f32.xlu0 %v35
  %v37 = vpop.xlane.xlu0 %36
  %v38 = vrcp.pop 64.0
  %v39 = vmul.f32 %v34, %v38
  %v40 = vmul.f32 %v37, %v38
  %v41 = vsub.f32 %v29, %v39
  %v42 = vsub.f32 %v30, %v40
  %v43 = vmul.f32 %v41, %v41
  %v44 = vmul.f32 %v42, %v42
  %v45 = vsel %vm31, %v43, 0.0
  %46 = vadd.xlane.f32.xlu0 %v45
  %v47 = vpop.xlane.xlu0 %46
  %v48 = vsel %vm31, %v44, 0.0
  %49 = vadd.xlane.f32.xlu0 %v48
  %v50 = vpop.xlane.xlu0 %49
  %v51 = vmul.f32 %v47, %v38
  %v52 = vmul.f32 %v50, %v38
  %v53 = vadd.f32 %v51, 1e-05
  %v54 = vadd.f32 %v52, 1e-05
  %v55 = vrsqrt.pop %v53
  %v56 = vrsqrt.pop %v54
  %v57 = vmul.f32 %v41, %v55
  %v58 = vmul.f32 %v42, %v56
  %v59 = vld [vmem:[%s1] sm:$0x1]
  %v61 = vlaneseq
  %v62 = vshrl.u32 %v61, 7
  %v63 = vsub.s32 0, %v62
  %v64 = vrot.slane %v59, %v63
  %v66 = vmul.f32 %v57, %v64
  %v67 = vmul.f32 %v58, %v64
  %v68 = vld [vmem:[%s2] sm:$0x1]
  %v70 = vlaneseq
  %v71 = vshrl.u32 %v70, 7
  %v72 = vsub.s32 0, %v71
  %v73 = vrot.slane %v68, %v72
  %v75 = vadd.f32 %v66, %v73
  %v76 = vadd.f32 %v67, %v73
  %v77 = vpack.c.bf16 %v76, %v75
  %v78 = vld [vmem:[%s3] sm:$0xf]
  %v79 = vld [vmem:[%s3 + $0x4] sm:$0xf]
  %v80 = vld [vmem:[%s3 + $0x8] sm:$0xf]
  %v81 = vld [vmem:[%s3 + $0xc] sm:$0xf]
  %v82 = vld [vmem:[%s3 + $0x10] sm:$0xf]
  %v83 = vld [vmem:[%s3 + $0x14] sm:$0xf]
  %v84 = vld [vmem:[%s3 + $0x18] sm:$0xf]
  %v85 = vld [vmem:[%s3 + $0x1c] sm:$0xf]
  %v86 = vld [vmem:[%s4] sm:$0x1]
  %v88 = vlaneseq
  %v89 = vshrl.u32 %v88, 7
  %v90 = vsub.s32 0, %v89
  %v91 = vrot.slane %v86, %v90
  %v101 = vunpack.c.l.b16 %v78
  %v102 = vunpack.c.l.b16 %v79
  %v103 = vunpack.c.l.b16 %v80
  %v104 = vunpack.c.l.b16 %v81
  %v105 = vunpack.c.l.b16 %v82
  %v106 = vunpack.c.l.b16 %v83
  %v107 = vunpack.c.l.b16 %v84
  %v108 = vunpack.c.l.b16 %v85
  %v109 = vpack.c.b16 %v102, %v101
  %v110 = vpack.c.b16 %v104, %v103
  %v111 = vpack.c.b16 %v106, %v105
  %v112 = vpack.c.b16 %v108, %v107
  %v118 = vsel %vm31, %v77, 0
  %120 = vmatprep.subr.bf16.mxu0 0
  %121 = vmatpush1.bf16.msra.mxu0 %v109
  %122 = vmatprep.subr.bf16.mxu0 0
  %123 = vmatpush1.bf16.msra.mxu0 %v110
  %124 = vmatprep.subr.bf16.mxu0 0
  %125 = vmatpush1.bf16.msra.mxu0 %v111
  %126 = vmatprep.subr.bf16.mxu0 0
  %127 = vmatpush1.bf16.msra.mxu0 %v112
  %128 = vmatprep.subr.bf16.mxu0 0
  %129 = vmatpush1.bf16.msra.mxu0 0
  %130 = vmatprep.subr.bf16.mxu0 0
  %131 = vmatpush1.bf16.msra.mxu0 0
  %132 = vmatprep.subr.bf16.mxu0 0
  %133 = vmatpush1.bf16.msra.mxu0 0
  %134 = vmatprep.subr.bf16.mxu0 0
  %135 = vmatpush1.bf16.msra.mxu0 0
  %136 = vmatprep.subr.bf16.mxu0 0
  %137 = vmatpush1.bf16.msra.mxu0 0
  %138 = vmatprep.subr.bf16.mxu0 0
  %139 = vmatpush1.bf16.msra.mxu0 0
  %140 = vmatprep.subr.bf16.mxu0 0
  %141 = vmatpush1.bf16.msra.mxu0 0
  %142 = vmatprep.subr.bf16.mxu0 0
  %143 = vmatpush1.bf16.msra.mxu0 0
  %144 = vmatprep.subr.bf16.mxu0 0
  %145 = vmatpush1.bf16.msra.mxu0 0
  %146 = vmatprep.subr.bf16.mxu0 0
  %147 = vmatpush1.bf16.msra.mxu0 0
  %148 = vmatprep.subr.bf16.mxu0 0
  %149 = vmatpush1.bf16.msra.mxu0 0
  %150 = vmatprep.subr.bf16.mxu0 0
  %151 = vmatpush1.bf16.msra.mxu0 0
  %152 = vmatprep.mubr.bf16.mxu0 0
  %153 = vmatmul.mubr.bf16.gmra.mrb[0].mxu0 %v118
  %v154 = vpop.f32.mrb[0].mxu0
  %v155 = vadd.f32 %v91, %v154
  %v156 = vpop.f32.mrb[0].mxu0
  %v157 = vpop.f32.mrb[0].mxu0
  %v158 = vadd.f32 %v91, %v157
  %v159 = vpop.f32.mrb[0].mxu0
  %160 = vdwg.mxu0
  %v161 = vmax.f32 %v155, 0.0
  %v162 = vmax.f32 %v158, 0.0
  %v163 = vsel %vm31, %v161, 0.0
  %164 = vadd.xlane.f32.xlu0 %v163
  %v165 = vpop.xlane.xlu0 %164
  %v166 = vsel %vm31, %v162, 0.0
  %167 = vadd.xlane.f32.xlu0 %v166
  %v168 = vpop.xlane.xlu0 %167
  %v169 = vmul.f32 %v165, %v38
  %v170 = vmul.f32 %v168, %v38
  %v171 = vsub.f32 %v161, %v169
  %v172 = vsub.f32 %v162, %v170
  %v173 = vmul.f32 %v171, %v171
  %v174 = vmul.f32 %v172, %v172
  %v175 = vsel %vm31, %v173, 0.0
  %176 = vadd.xlane.f32.xlu0 %v175
  %v177 = vpop.xlane.xlu0 %176
  %v178 = vsel %vm31, %v174, 0.0
  %179 = vadd.xlane.f32.xlu0 %v178
  %v180 = vpop.xlane.xlu0 %179
  %v181 = vmul.f32 %v177, %v38
  %v182 = vmul.f32 %v180, %v38
  %v183 = vadd.f32 %v181, 1e-05
  %v184 = vadd.f32 %v182, 1e-05
  %v185 = vrsqrt.pop %v183
  %v186 = vrsqrt.pop %v184
  %v187 = vmul.f32 %v171, %v185
  %v188 = vmul.f32 %v172, %v186
  %v189 = vld [vmem:[%s5] sm:$0x1]
  %v191 = vlaneseq
  %v192 = vshrl.u32 %v191, 7
  %v193 = vsub.s32 0, %v192
  %v194 = vrot.slane %v189, %v193
  %v196 = vmul.f32 %v187, %v194
  %v197 = vmul.f32 %v188, %v194
  %v198 = vld [vmem:[%s6] sm:$0x1]
  %v200 = vlaneseq
  %v201 = vshrl.u32 %v200, 7
  %v202 = vsub.s32 0, %v201
  %v203 = vrot.slane %v198, %v202
  %v205 = vadd.f32 %v196, %v203
  %v206 = vadd.f32 %v197, %v203
  %v207 = vpack.c.bf16 %v206, %v205
  %v209 = vunpack.c.l.b16 %v207
  %v210 = vunpack.c.h.b16 %v207
  %v211 = vpack.c.b16 %v209, %v209
  %v212 = vpack.c.b16 %v210, %v210
  %vm215 = vcmask 519168
  %216 = vst.msk [vmem:[%s7] sm:$0xf] %vm215, %v211
  %217 = vst.msk [vmem:[%s7 + $0x4] sm:$0xf] %vm215, %v212
  // Predicated region
  $region30: #{forward.7} parent=0 // pred_check
    _
  $region31: #{forward.7} parent=0 // pred_check_branch
    %219 = sbr.rel (0) target = $region33
  $region32: #{forward.7} parent=0 // pred_region
    _
  $region33: #{forward.7} parent=0 // pred_fallthru
    _
  // Predicated region
  $region34: #{forward.7} parent=0 // pred_check
    _
  $region35: #{forward.7} parent=0 // pred_check_branch
    %221 = sbr.rel (0) target = $region37
  $region36: #{forward.7} parent=0 // pred_region
    _
  $region37: #{forward.7} parent=0 // pred_fallthru
    _

</llo_original>
